<compile_context>
chip_gen: v5e
topology: v5e:2x2
jax: 0.10.0
libtpu: 0.0.40
codegen_flags: <defaults>
</compile_context>

<pallas_src>
import functools

import jax
import jax.numpy as jnp
from jax.experimental import pallas as pl
from jax.experimental.pallas import tpu as pltpu

N_SIDES = 4


# ----------------------------------------------------------------------------
# Fused Pallas kernel: embedding + GNN backbone + value decoder + head
# ----------------------------------------------------------------------------
def _critic_kernel(tiles_ref, emb_ref,
                   bb_ws_ref, bb_wm_ref, bb_b_ref,
                   q0_ref,
                   wq_ref, wkv_ref, wo_ref,
                   w1_ref, b1_ref, w2_ref, b2_ref,
                   wh_ref, bh_ref,
                   mask_eh_ref, mask_he_ref,
                   seg_sum_ref, seg_exp_ref,
                   out_ref, *, n_heads, tokens_per_board):
    """One batch-tile of the full Critic forward.

    tiles_ref : (BT, S)    int32 tile-side class ids (BT = batch_tile * T)
    emb_ref   : (C, E)     embedding table
    bb_ws/bb_wm: (L, E, E) backbone self / message weights; bb_b: (L, 1, E)
    q0_ref    : (1, E)     value query (shared across batch)
    wq/wo     : (Ld, E, E) ; wkv: (Ld, E, 2E) fused [K|V] projection
    w1: (Ld, E, F); b1: (Ld, 1, F); w2: (Ld, F, E); b2: (Ld, 1, E)
    wh: (E, 1);  bh: (1, 1)
    mask_eh: (E, H); mask_he: (H, E)   head-membership masks
    seg_sum: (bt, BT) block-diag ones; seg_exp: (BT, bt) block-diag ones
    out_ref: (bt, 128)    value broadcast along lanes (lane-dense store)
    """
    BT, S = tiles_ref.shape
    C, E = emb_ref.shape
    T = tokens_per_board
    bt = BT // T
    dh = E // n_heads
    scale = 1.0 / jnp.sqrt(jnp.float32(dh))
    inv_T = 1.0 / jnp.float32(T)

    seg_sum = seg_sum_ref[...]                       # (bt, BT)  sum over segment
    seg_exp = seg_exp_ref[...]                       # (BT, bt)  broadcast per-batch row
    mask_eh = mask_eh_ref[...]                       # (E, H)
    mask_he = mask_he_ref[...]                       # (H, E)

    # --- fused embedding: counts[r, c] = #sides of token r with class c ------
    ids = tiles_ref[...]                             # (BT, S) int32
    cls = jax.lax.broadcasted_iota(jnp.int32, (BT, C), 1)
    counts = jnp.zeros((BT, C), jnp.float32)
    for s in range(S):                               # S = N_SIDES, static unroll
        counts = counts + (ids[:, s:s + 1] == cls).astype(jnp.float32)
    h = jnp.dot(counts, emb_ref[...], preferred_element_type=jnp.float32)   # (BT, E)

    # --- GNN backbone: h = relu(h @ Ws + broadcast(mean_T(h) @ Wm) + b) ------
    n_bb = bb_ws_ref.shape[0]
    for l in range(n_bb):                            # static unroll (small L)
        mean_b = jnp.dot(seg_sum, h, preferred_element_type=jnp.float32) * inv_T   # (bt, E)
        msg_b = jnp.dot(mean_b, bb_wm_ref[l], preferred_element_type=jnp.float32)  # (bt, E)
        slf = jnp.dot(h, bb_ws_ref[l], preferred_element_type=jnp.float32)         # (BT, E)
        msg = jnp.dot(seg_exp, msg_b, preferred_element_type=jnp.float32)          # (BT, E)
        h = jnp.maximum(slf + msg + bb_b_ref[l], 0.0)

    # --- value decoder: batched multi-head cross-attention + MLP per layer ---
    q = jnp.broadcast_to(q0_ref[...], (bt, E))       # (bt, E) batched queries
    n_dec = wq_ref.shape[0]
    for l in range(n_dec):                           # static unroll (small Ld)
        qh = jnp.dot(q, wq_ref[l], preferred_element_type=jnp.float32)       # (bt, E)
        kv = jnp.dot(h, wkv_ref[l], preferred_element_type=jnp.float32)      # (BT, 2E)
        K = kv[:, :E]
        V = kv[:, E:]
        qh_rows = jnp.dot(seg_exp, qh, preferred_element_type=jnp.float32)   # (BT, E)
        # per-head scores: sum of qh*K over each head's channel block
        scores = jnp.dot(qh_rows * K, mask_eh,
                         preferred_element_type=jnp.float32) * scale         # (BT, H)
        # stable softmax over T within each batch segment: subtracting a
        # per-head global max is segment-invariant and avoids a reshape.
        scores = scores - jnp.max(scores, axis=0, keepdims=True)
        p_un = jnp.exp(scores)                                               # (BT, H)
        denom = jnp.dot(seg_sum, p_un, preferred_element_type=jnp.float32)   # (bt, H)
        denom_rows = jnp.dot(seg_exp, denom, preferred_element_type=jnp.float32)
        p = p_un / denom_rows                                                # (BT, H)
        attn = jnp.dot(p, mask_he, preferred_element_type=jnp.float32)       # (BT, E)
        ctx = jnp.dot(seg_sum, attn * V, preferred_element_type=jnp.float32) # (bt, E)
        q = q + jnp.dot(ctx, wo_ref[l], preferred_element_type=jnp.float32)  # residual
        # feed-forward (dropout inactive, eval mode)
        hid = jnp.maximum(
            jnp.dot(q, w1_ref[l], preferred_element_type=jnp.float32) + b1_ref[l], 0.0)
        q = q + jnp.dot(hid, w2_ref[l], preferred_element_type=jnp.float32) + b2_ref[l]

    # --- value head, lane-dense store ----------------------------------------
    val = jnp.dot(q, wh_ref[...], preferred_element_type=jnp.float32) + bh_ref[...]  # (bt, 1)
    out_ref[...] = jnp.broadcast_to(val, out_ref.shape)                      # (bt, 128)


# ----------------------------------------------------------------------------
# Wrapper (pallas_call plumbing)
# ----------------------------------------------------------------------------
def critic_pallas(tiles_flat, params, *, n_heads, tokens_per_board, batch_tile=None):
    """tiles_flat: int32 (B*T, N_SIDES) -> values (B,)."""
    BT_total, S = tiles_flat.shape
    T = tokens_per_board
    B = BT_total // T
    emb = params["emb"]
    C, E = emb.shape
    dec = params["dec"]
    L = params["bb_ws"].shape[0]
    Ld = dec["wq"].shape[0]
    F = dec["w1"].shape[-1]
    H = n_heads
    assert E % H == 0, "embedding_dim must be divisible by n_heads"

    bt = B if batch_tile is None else batch_tile
    assert B % bt == 0
    nb = B // bt
    # On v7x, a >=2-wide parallel grid uses both TensorCores; block constraints
    # then require the batch tile to be sublane friendly.
    assert nb == 1 or (bt % 8 == 0 and (bt * T) % 8 == 0), \
        "when splitting the batch across grid steps, batch_tile must be a multiple of 8"

    # Host-side precomputed constants (hoisted out of the kernel).
    dh = E // H
    mask_eh = (jnp.arange(E)[:, None] // dh == jnp.arange(H)[None, :]).astype(jnp.float32)
    mask_he = mask_eh.T
    row_seg = jnp.arange(bt * T) // T
    seg_exp = (row_seg[:, None] == jnp.arange(bt)[None, :]).astype(jnp.float32)  # (bt*T, bt)
    seg_sum = seg_exp.T                                                          # (bt, bt*T)

    full = lambda *shape: pl.BlockSpec(shape, lambda i: (0,) * len(shape))

    out = pl.pallas_call(
        functools.partial(_critic_kernel, n_heads=H, tokens_per_board=T),
        out_shape=jax.ShapeDtypeStruct((B, 128), jnp.float32),
        grid=(nb,),
        in_specs=[
            pl.BlockSpec((bt * T, S), lambda i: (i, 0)),        # tile ids
            full(C, E),                                          # embedding table
            full(L, E, E), full(L, E, E), full(L, 1, E),         # backbone
            full(1, E),                                          # value query
            full(Ld, E, E), full(Ld, E, 2 * E), full(Ld, E, E),  # wq, [wk|wv], wo
            full(Ld, E, F), full(Ld, 1, F), full(Ld, F, E), full(Ld, 1, E),
            full(E, 1), full(1, 1),                              # head
            full(E, H), full(H, E),                              # head masks
            full(bt, bt * T), full(bt * T, bt),                  # segment matrices
        ],
        out_specs=pl.BlockSpec((bt, 128), lambda i: (i, 0)),
        compiler_params=pltpu.CompilerParams(
            dimension_semantics=("parallel",)),
    )(tiles_flat, emb,
      params["bb_ws"], params["bb_wm"], params["bb_b"],
      params["value_query"].reshape(1, E),
      dec["wq"], dec["wkv"], dec["wo"],
      dec["w1"], dec["b1"], dec["w2"], dec["b2"],
      dec["wh"], dec["bh"],
      mask_eh, mask_he, seg_sum, seg_exp)
    return out[:, 0]


# ----------------------------------------------------------------------------
# Parameter init + full Critic forward
# ----------------------------------------------------------------------------
def init_params(key, *, embedding_dim, n_heads, backbone_layers, decoder_layers,
                n_classes):
    E, L, Ld, F = embedding_dim, backbone_layers, decoder_layers, 4 * embedding_dim
    ks = jax.random.split(key, 12)
    s = 0.1
    return {
        "emb": jax.random.normal(ks[0], (n_classes, E), jnp.float32) * s,
        "bb_ws": jax.random.normal(ks[1], (L, E, E), jnp.float32) * s,
        "bb_wm": jax.random.normal(ks[2], (L, E, E), jnp.float32) * s,
        "bb_b": jnp.zeros((L, 1, E), jnp.float32),
        "value_query": jax.random.normal(ks[3], (E,), jnp.float32),
        "dec": {
            "wq": jax.random.normal(ks[4], (Ld, E, E), jnp.float32) * s,
            # fused [K | V] projection weight
            "wkv": jax.random.normal(ks[5], (Ld, E, 2 * E), jnp.float32) * s,
            "wo": jax.random.normal(ks[7], (Ld, E, E), jnp.float32) * s,
            "w1": jax.random.normal(ks[8], (Ld, E, F), jnp.float32) * s,
            "b1": jnp.zeros((Ld, 1, F), jnp.float32),
            "w2": jax.random.normal(ks[9], (Ld, F, E), jnp.float32) * s,
            "b2": jnp.zeros((Ld, 1, E), jnp.float32),
            "wh": jax.random.normal(ks[10], (E, 1), jnp.float32) * s,
            "bh": jnp.zeros((1, 1), jnp.float32),
        },
    }


@functools.partial(jax.jit, static_argnames=("n_heads",))
def critic_forward(tiles, params, *, n_heads):
    """tiles: int32 [B, N_SIDES, H, W]  ->  values: float32 [B]."""
    B, S, Hb, Wb = tiles.shape
    T = Hb * Wb
    # Only glue left in XLA: reshape the integer ids to (B*T, N_SIDES);
    # embedding lookup itself happens inside the fused kernel.
    tiles_flat = jnp.transpose(tiles, (0, 2, 3, 1)).reshape(B * T, S).astype(jnp.int32)
    return critic_pallas(tiles_flat, params, n_heads=n_heads, tokens_per_board=T)


# ----------------------------------------------------------------------------
if __name__ == "__main__":
    embedding_dim = 32
    n_heads = 4
    backbone_layers = 2
    decoder_layers = 2
    n_classes = 8           # number of distinct tile-side classes
    batch, board_h, board_w = 2, 4, 4

    key = jax.random.PRNGKey(0)
    kp, kt = jax.random.split(key)
    params = init_params(kp, embedding_dim=embedding_dim, n_heads=n_heads,
                         backbone_layers=backbone_layers,
                         decoder_layers=decoder_layers, n_classes=n_classes)
    tiles = jax.random.randint(kt, (batch, N_SIDES, board_h, board_w),
                               0, n_classes, dtype=jnp.int32)

    values = critic_forward(tiles, params, n_heads=n_heads)
    values = jax.block_until_ready(values)
    assert values.shape == (batch,), values.shape
    assert bool(jnp.all(jnp.isfinite(values)))
    print("KERNEL_OK")
</pallas_src>

<mosaic_0001>
module attributes {stable_mosaic.version = 11 : i64} {
  func.func @_critic_kernel(%arg0: i32, %arg1: memref<32x4xi32, #tpu.memory_space<vmem>>, %arg2: memref<8x32xf32, #tpu.memory_space<vmem>>, %arg3: memref<2x32x32xf32, #tpu.memory_space<vmem>>, %arg4: memref<2x32x32xf32, #tpu.memory_space<vmem>>, %arg5: memref<2x1x32xf32, #tpu.memory_space<vmem>>, %arg6: memref<1x32xf32, #tpu.memory_space<vmem>>, %arg7: memref<2x32x32xf32, #tpu.memory_space<vmem>>, %arg8: memref<2x32x64xf32, #tpu.memory_space<vmem>>, %arg9: memref<2x32x32xf32, #tpu.memory_space<vmem>>, %arg10: memref<2x32x128xf32, #tpu.memory_space<vmem>>, %arg11: memref<2x1x128xf32, #tpu.memory_space<vmem>>, %arg12: memref<2x128x32xf32, #tpu.memory_space<vmem>>, %arg13: memref<2x1x32xf32, #tpu.memory_space<vmem>>, %arg14: memref<32x1xf32, #tpu.memory_space<vmem>>, %arg15: memref<1x1xf32, #tpu.memory_space<vmem>>, %arg16: memref<32x4xf32, #tpu.memory_space<vmem>>, %arg17: memref<4x32xf32, #tpu.memory_space<vmem>>, %arg18: memref<2x32xf32, #tpu.memory_space<vmem>>, %arg19: memref<32x2xf32, #tpu.memory_space<vmem>>, %arg20: memref<2x128xf32, #tpu.memory_space<vmem>>) attributes {dimension_semantics = [#tpu.dimension_semantics<parallel>], iteration_bounds = array<i64: 1>, scalar_prefetch = 0 : i64, scratch_operands = 0 : i64, tpu.core_type = #tpu.core_type<tc>, window_params = [{transform_indices = @transform_0, window_bounds = array<i64: 32, 4>}, {pipeline_mode = #tpu.pipeline_mode<synchronous>, transform_indices = @transform_1, window_bounds = array<i64: 8, 32>}, {pipeline_mode = #tpu.pipeline_mode<synchronous>, transform_indices = @transform_2, window_bounds = array<i64: 2, 32, 32>}, {pipeline_mode = #tpu.pipeline_mode<synchronous>, transform_indices = @transform_3, window_bounds = array<i64: 2, 32, 32>}, {pipeline_mode = #tpu.pipeline_mode<synchronous>, transform_indices = @transform_4, window_bounds = array<i64: 2, 1, 32>}, {pipeline_mode = #tpu.pipeline_mode<synchronous>, transform_indices = @transform_5, window_bounds = array<i64: 1, 32>}, {pipeline_mode = #tpu.pipeline_mode<synchronous>, transform_indices = @transform_6, window_bounds = array<i64: 2, 32, 32>}, {pipeline_mode = #tpu.pipeline_mode<synchronous>, transform_indices = @transform_7, window_bounds = array<i64: 2, 32, 64>}, {pipeline_mode = #tpu.pipeline_mode<synchronous>, transform_indices = @transform_8, window_bounds = array<i64: 2, 32, 32>}, {pipeline_mode = #tpu.pipeline_mode<synchronous>, transform_indices = @transform_9, window_bounds = array<i64: 2, 32, 128>}, {pipeline_mode = #tpu.pipeline_mode<synchronous>, transform_indices = @transform_10, window_bounds = array<i64: 2, 1, 128>}, {pipeline_mode = #tpu.pipeline_mode<synchronous>, transform_indices = @transform_11, window_bounds = array<i64: 2, 128, 32>}, {pipeline_mode = #tpu.pipeline_mode<synchronous>, transform_indices = @transform_12, window_bounds = array<i64: 2, 1, 32>}, {pipeline_mode = #tpu.pipeline_mode<synchronous>, transform_indices = @transform_13, window_bounds = array<i64: 32, 1>}, {pipeline_mode = #tpu.pipeline_mode<synchronous>, transform_indices = @transform_14, window_bounds = array<i64: 1, 1>}, {pipeline_mode = #tpu.pipeline_mode<synchronous>, transform_indices = @transform_15, window_bounds = array<i64: 32, 4>}, {pipeline_mode = #tpu.pipeline_mode<synchronous>, transform_indices = @transform_16, window_bounds = array<i64: 4, 32>}, {pipeline_mode = #tpu.pipeline_mode<synchronous>, transform_indices = @transform_17, window_bounds = array<i64: 2, 32>}, {pipeline_mode = #tpu.pipeline_mode<synchronous>, transform_indices = @transform_18, window_bounds = array<i64: 32, 2>}, {transform_indices = @transform_19, window_bounds = array<i64: 2, 128>}]} {
    %cst = arith.constant 8.000000e+00 : f32
    %0 = math.sqrt %cst : f32
    %cst_0 = arith.constant 1.000000e+00 : f32
    %1 = arith.divf %cst_0, %0 : f32
    %cst_1 = arith.constant 1.000000e+00 : f32
    %cst_2 = arith.constant 1.600000e+01 : f32
    %2 = arith.divf %cst_1, %cst_2 : f32
    %c0 = arith.constant 0 : index
    %c0_3 = arith.constant 0 : index
    %3 = vector.load %arg18[%c0, %c0_3] : memref<2x32xf32, #tpu.memory_space<vmem>>, vector<2x32xf32>
    %c0_4 = arith.constant 0 : index
    %c0_5 = arith.constant 0 : index
    %4 = vector.load %arg19[%c0_4, %c0_5] : memref<32x2xf32, #tpu.memory_space<vmem>>, vector<32x2xf32>
    %c0_6 = arith.constant 0 : index
    %c0_7 = arith.constant 0 : index
    %5 = vector.load %arg16[%c0_6, %c0_7] : memref<32x4xf32, #tpu.memory_space<vmem>>, vector<32x4xf32>
    %c0_8 = arith.constant 0 : index
    %c0_9 = arith.constant 0 : index
    %6 = vector.load %arg17[%c0_8, %c0_9] : memref<4x32xf32, #tpu.memory_space<vmem>>, vector<4x32xf32>
    %c0_10 = arith.constant 0 : index
    %c0_11 = arith.constant 0 : index
    %7 = vector.load %arg1[%c0_10, %c0_11] : memref<32x4xi32, #tpu.memory_space<vmem>>, vector<32x4xi32>
    %8 = tpu.iota {dimensions = array<i32: 1>} : vector<32x8xi32>
    %cst_12 = arith.constant 0.000000e+00 : f32
    %9 = vector.broadcast %cst_12 : f32 to vector<32x8xf32>
    %10 = vector.extract_strided_slice %7 {offsets = [0, 0], sizes = [32, 1], strides = [1, 1]} : vector<32x4xi32> to vector<32x1xi32>
    %11 = vector.broadcast %10 : vector<32x1xi32> to vector<32x8xi32>
    %12 = arith.cmpi eq, %11, %8 : vector<32x8xi32>
    %13 = arith.extui %12 : vector<32x8xi1> to vector<32x8xi32>
    %14 = arith.sitofp %13 : vector<32x8xi32> to vector<32x8xf32>
    %15 = arith.addf %9, %14 : vector<32x8xf32>
    %16 = vector.extract_strided_slice %7 {offsets = [0, 1], sizes = [32, 1], strides = [1, 1]} : vector<32x4xi32> to vector<32x1xi32>
    %17 = vector.broadcast %16 : vector<32x1xi32> to vector<32x8xi32>
    %18 = arith.cmpi eq, %17, %8 : vector<32x8xi32>
    %19 = arith.extui %18 : vector<32x8xi1> to vector<32x8xi32>
    %20 = arith.sitofp %19 : vector<32x8xi32> to vector<32x8xf32>
    %21 = arith.addf %15, %20 : vector<32x8xf32>
    %22 = vector.extract_strided_slice %7 {offsets = [0, 2], sizes = [32, 1], strides = [1, 1]} : vector<32x4xi32> to vector<32x1xi32>
    %23 = vector.broadcast %22 : vector<32x1xi32> to vector<32x8xi32>
    %24 = arith.cmpi eq, %23, %8 : vector<32x8xi32>
    %25 = arith.extui %24 : vector<32x8xi1> to vector<32x8xi32>
    %26 = arith.sitofp %25 : vector<32x8xi32> to vector<32x8xf32>
    %27 = arith.addf %21, %26 : vector<32x8xf32>
    %28 = vector.extract_strided_slice %7 {offsets = [0, 3], sizes = [32, 1], strides = [1, 1]} : vector<32x4xi32> to vector<32x1xi32>
    %29 = vector.broadcast %28 : vector<32x1xi32> to vector<32x8xi32>
    %30 = arith.cmpi eq, %29, %8 : vector<32x8xi32>
    %31 = arith.extui %30 : vector<32x8xi1> to vector<32x8xi32>
    %32 = arith.sitofp %31 : vector<32x8xi32> to vector<32x8xf32>
    %33 = arith.addf %27, %32 : vector<32x8xf32>
    %c0_13 = arith.constant 0 : index
    %c0_14 = arith.constant 0 : index
    %34 = vector.load %arg2[%c0_13, %c0_14] : memref<8x32xf32, #tpu.memory_space<vmem>>, vector<8x32xf32>
    %cst_15 = arith.constant dense<0.000000e+00> : vector<32x32xf32>
    %35 = tpu.matmul %33, %34, %cst_15 {dimension_numbers = #tpu.dot_dimension_numbers<[1], [0], [0], [1], [0, 0, 1, 1], [], []>} : vector<32x8xf32>, vector<8x32xf32>, vector<32x32xf32> -> vector<32x32xf32>
    %cst_16 = arith.constant dense<0.000000e+00> : vector<2x32xf32>
    %36 = tpu.matmul %3, %35, %cst_16 {dimension_numbers = #tpu.dot_dimension_numbers<[1], [0], [0], [1], [0, 0, 1, 1], [], []>} : vector<2x32xf32>, vector<32x32xf32>, vector<2x32xf32> -> vector<2x32xf32>
    %37 = vector.broadcast %2 : f32 to vector<2x32xf32>
    %38 = arith.mulf %36, %37 : vector<2x32xf32>
    %c0_17 = arith.constant 0 : index
    %c0_18 = arith.constant 0 : index
    %c0_19 = arith.constant 0 : index
    %39 = vector.load %arg4[%c0_17, %c0_18, %c0_19] : memref<2x32x32xf32, #tpu.memory_space<vmem>>, vector<1x32x32xf32>
    %40 = vector.shape_cast %39 : vector<1x32x32xf32> to vector<32x32xf32>
    %cst_20 = arith.constant dense<0.000000e+00> : vector<2x32xf32>
    %41 = tpu.matmul %38, %40, %cst_20 {dimension_numbers = #tpu.dot_dimension_numbers<[1], [0], [0], [1], [0, 0, 1, 1], [], []>} : vector<2x32xf32>, vector<32x32xf32>, vector<2x32xf32> -> vector<2x32xf32>
    %c0_21 = arith.constant 0 : index
    %c0_22 = arith.constant 0 : index
    %c0_23 = arith.constant 0 : index
    %42 = vector.load %arg3[%c0_21, %c0_22, %c0_23] : memref<2x32x32xf32, #tpu.memory_space<vmem>>, vector<1x32x32xf32>
    %43 = vector.shape_cast %42 : vector<1x32x32xf32> to vector<32x32xf32>
    %cst_24 = arith.constant dense<0.000000e+00> : vector<32x32xf32>
    %44 = tpu.matmul %35, %43, %cst_24 {dimension_numbers = #tpu.dot_dimension_numbers<[1], [0], [0], [1], [0, 0, 1, 1], [], []>} : vector<32x32xf32>, vector<32x32xf32>, vector<32x32xf32> -> vector<32x32xf32>
    %cst_25 = arith.constant dense<0.000000e+00> : vector<32x32xf32>
    %45 = tpu.matmul %4, %41, %cst_25 {dimension_numbers = #tpu.dot_dimension_numbers<[1], [0], [0], [1], [0, 0, 1, 1], [], []>} : vector<32x2xf32>, vector<2x32xf32>, vector<32x32xf32> -> vector<32x32xf32>
    %46 = arith.addf %44, %45 : vector<32x32xf32>
    %c0_26 = arith.constant 0 : index
    %c0_27 = arith.constant 0 : index
    %c0_28 = arith.constant 0 : index
    %47 = vector.load %arg5[%c0_26, %c0_27, %c0_28] : memref<2x1x32xf32, #tpu.memory_space<vmem>>, vector<1x1x32xf32>
    %48 = vector.shape_cast %47 : vector<1x1x32xf32> to vector<1x32xf32>
    %49 = vector.broadcast %48 : vector<1x32xf32> to vector<32x32xf32>
    %50 = arith.addf %46, %49 : vector<32x32xf32>
    %cst_29 = arith.constant 0.000000e+00 : f32
    %51 = vector.broadcast %cst_29 : f32 to vector<32x32xf32>
    %52 = arith.maximumf %50, %51 : vector<32x32xf32>
    %cst_30 = arith.constant dense<0.000000e+00> : vector<2x32xf32>
    %53 = tpu.matmul %3, %52, %cst_30 {dimension_numbers = #tpu.dot_dimension_numbers<[1], [0], [0], [1], [0, 0, 1, 1], [], []>} : vector<2x32xf32>, vector<32x32xf32>, vector<2x32xf32> -> vector<2x32xf32>
    %54 = vector.broadcast %2 : f32 to vector<2x32xf32>
    %55 = arith.mulf %53, %54 : vector<2x32xf32>
    %c1 = arith.constant 1 : index
    %c0_31 = arith.constant 0 : index
    %c0_32 = arith.constant 0 : index
    %56 = vector.load %arg4[%c1, %c0_31, %c0_32] : memref<2x32x32xf32, #tpu.memory_space<vmem>>, vector<1x32x32xf32>
    %57 = vector.shape_cast %56 : vector<1x32x32xf32> to vector<32x32xf32>
    %cst_33 = arith.constant dense<0.000000e+00> : vector<2x32xf32>
    %58 = tpu.matmul %55, %57, %cst_33 {dimension_numbers = #tpu.dot_dimension_numbers<[1], [0], [0], [1], [0, 0, 1, 1], [], []>} : vector<2x32xf32>, vector<32x32xf32>, vector<2x32xf32> -> vector<2x32xf32>
    %c1_34 = arith.constant 1 : index
    %c0_35 = arith.constant 0 : index
    %c0_36 = arith.constant 0 : index
    %59 = vector.load %arg3[%c1_34, %c0_35, %c0_36] : memref<2x32x32xf32, #tpu.memory_space<vmem>>, vector<1x32x32xf32>
    %60 = vector.shape_cast %59 : vector<1x32x32xf32> to vector<32x32xf32>
    %cst_37 = arith.constant dense<0.000000e+00> : vector<32x32xf32>
    %61 = tpu.matmul %52, %60, %cst_37 {dimension_numbers = #tpu.dot_dimension_numbers<[1], [0], [0], [1], [0, 0, 1, 1], [], []>} : vector<32x32xf32>, vector<32x32xf32>, vector<32x32xf32> -> vector<32x32xf32>
    %cst_38 = arith.constant dense<0.000000e+00> : vector<32x32xf32>
    %62 = tpu.matmul %4, %58, %cst_38 {dimension_numbers = #tpu.dot_dimension_numbers<[1], [0], [0], [1], [0, 0, 1, 1], [], []>} : vector<32x2xf32>, vector<2x32xf32>, vector<32x32xf32> -> vector<32x32xf32>
    %63 = arith.addf %61, %62 : vector<32x32xf32>
    %c1_39 = arith.constant 1 : index
    %c0_40 = arith.constant 0 : index
    %c0_41 = arith.constant 0 : index
    %64 = vector.load %arg5[%c1_39, %c0_40, %c0_41] : memref<2x1x32xf32, #tpu.memory_space<vmem>>, vector<1x1x32xf32>
    %65 = vector.shape_cast %64 : vector<1x1x32xf32> to vector<1x32xf32>
    %66 = vector.broadcast %65 : vector<1x32xf32> to vector<32x32xf32>
    %67 = arith.addf %63, %66 : vector<32x32xf32>
    %cst_42 = arith.constant 0.000000e+00 : f32
    %68 = vector.broadcast %cst_42 : f32 to vector<32x32xf32>
    %69 = arith.maximumf %67, %68 : vector<32x32xf32>
    %c0_43 = arith.constant 0 : index
    %c0_44 = arith.constant 0 : index
    %70 = vector.load %arg6[%c0_43, %c0_44] : memref<1x32xf32, #tpu.memory_space<vmem>>, vector<1x32xf32>
    %71 = vector.shape_cast %70 : vector<1x32xf32> to vector<1x32xf32>
    %72 = vector.broadcast %71 : vector<1x32xf32> to vector<2x32xf32>
    %c0_45 = arith.constant 0 : index
    %c0_46 = arith.constant 0 : index
    %c0_47 = arith.constant 0 : index
    %73 = vector.load %arg7[%c0_45, %c0_46, %c0_47] : memref<2x32x32xf32, #tpu.memory_space<vmem>>, vector<1x32x32xf32>
    %74 = vector.shape_cast %73 : vector<1x32x32xf32> to vector<32x32xf32>
    %cst_48 = arith.constant dense<0.000000e+00> : vector<2x32xf32>
    %75 = tpu.matmul %72, %74, %cst_48 {dimension_numbers = #tpu.dot_dimension_numbers<[1], [0], [0], [1], [0, 0, 1, 1], [], []>} : vector<2x32xf32>, vector<32x32xf32>, vector<2x32xf32> -> vector<2x32xf32>
    %c0_49 = arith.constant 0 : index
    %c0_50 = arith.constant 0 : index
    %c0_51 = arith.constant 0 : index
    %76 = vector.load %arg8[%c0_49, %c0_50, %c0_51] : memref<2x32x64xf32, #tpu.memory_space<vmem>>, vector<1x32x64xf32>
    %77 = vector.shape_cast %76 : vector<1x32x64xf32> to vector<32x64xf32>
    %cst_52 = arith.constant dense<0.000000e+00> : vector<32x64xf32>
    %78 = tpu.matmul %69, %77, %cst_52 {dimension_numbers = #tpu.dot_dimension_numbers<[1], [0], [0], [1], [0, 0, 1, 1], [], []>} : vector<32x32xf32>, vector<32x64xf32>, vector<32x64xf32> -> vector<32x64xf32>
    %79 = vector.extract_strided_slice %78 {offsets = [0, 0], sizes = [32, 32], strides = [1, 1]} : vector<32x64xf32> to vector<32x32xf32>
    %80 = vector.extract_strided_slice %78 {offsets = [0, 32], sizes = [32, 32], strides = [1, 1]} : vector<32x64xf32> to vector<32x32xf32>
    %cst_53 = arith.constant dense<0.000000e+00> : vector<32x32xf32>
    %81 = tpu.matmul %4, %75, %cst_53 {dimension_numbers = #tpu.dot_dimension_numbers<[1], [0], [0], [1], [0, 0, 1, 1], [], []>} : vector<32x2xf32>, vector<2x32xf32>, vector<32x32xf32> -> vector<32x32xf32>
    %82 = arith.mulf %81, %79 : vector<32x32xf32>
    %cst_54 = arith.constant dense<0.000000e+00> : vector<32x4xf32>
    %83 = tpu.matmul %82, %5, %cst_54 {dimension_numbers = #tpu.dot_dimension_numbers<[1], [0], [0], [1], [0, 0, 1, 1], [], []>} : vector<32x32xf32>, vector<32x4xf32>, vector<32x4xf32> -> vector<32x4xf32>
    %84 = vector.broadcast %1 : f32 to vector<32x4xf32>
    %85 = arith.mulf %83, %84 : vector<32x4xf32>
    %cst_55 = arith.constant dense<0xFF800000> : vector<4xf32>
    %86 = vector.multi_reduction <maximumf>, %85, %cst_55 [0] : vector<32x4xf32> to vector<4xf32>
    %87 = vector.shape_cast %86 : vector<4xf32> to vector<1x4xf32>
    %88 = vector.broadcast %87 : vector<1x4xf32> to vector<32x4xf32>
    %89 = arith.subf %85, %88 : vector<32x4xf32>
    %90 = math.exp %89 : vector<32x4xf32>
    %cst_56 = arith.constant dense<0.000000e+00> : vector<2x4xf32>
    %91 = tpu.matmul %3, %90, %cst_56 {dimension_numbers = #tpu.dot_dimension_numbers<[1], [0], [0], [1], [0, 0, 1, 1], [], []>} : vector<2x32xf32>, vector<32x4xf32>, vector<2x4xf32> -> vector<2x4xf32>
    %cst_57 = arith.constant dense<0.000000e+00> : vector<32x4xf32>
    %92 = tpu.matmul %4, %91, %cst_57 {dimension_numbers = #tpu.dot_dimension_numbers<[1], [0], [0], [1], [0, 0, 1, 1], [], []>} : vector<32x2xf32>, vector<2x4xf32>, vector<32x4xf32> -> vector<32x4xf32>
    %93 = arith.divf %90, %92 : vector<32x4xf32>
    %cst_58 = arith.constant dense<0.000000e+00> : vector<32x32xf32>
    %94 = tpu.matmul %93, %6, %cst_58 {dimension_numbers = #tpu.dot_dimension_numbers<[1], [0], [0], [1], [0, 0, 1, 1], [], []>} : vector<32x4xf32>, vector<4x32xf32>, vector<32x32xf32> -> vector<32x32xf32>
    %95 = arith.mulf %94, %80 : vector<32x32xf32>
    %cst_59 = arith.constant dense<0.000000e+00> : vector<2x32xf32>
    %96 = tpu.matmul %3, %95, %cst_59 {dimension_numbers = #tpu.dot_dimension_numbers<[1], [0], [0], [1], [0, 0, 1, 1], [], []>} : vector<2x32xf32>, vector<32x32xf32>, vector<2x32xf32> -> vector<2x32xf32>
    %c0_60 = arith.constant 0 : index
    %c0_61 = arith.constant 0 : index
    %c0_62 = arith.constant 0 : index
    %97 = vector.load %arg9[%c0_60, %c0_61, %c0_62] : memref<2x32x32xf32, #tpu.memory_space<vmem>>, vector<1x32x32xf32>
    %98 = vector.shape_cast %97 : vector<1x32x32xf32> to vector<32x32xf32>
    %cst_63 = arith.constant dense<0.000000e+00> : vector<2x32xf32>
    %99 = tpu.matmul %96, %98, %cst_63 {dimension_numbers = #tpu.dot_dimension_numbers<[1], [0], [0], [1], [0, 0, 1, 1], [], []>} : vector<2x32xf32>, vector<32x32xf32>, vector<2x32xf32> -> vector<2x32xf32>
    %100 = arith.addf %72, %99 : vector<2x32xf32>
    %c0_64 = arith.constant 0 : index
    %c0_65 = arith.constant 0 : index
    %c0_66 = arith.constant 0 : index
    %101 = vector.load %arg10[%c0_64, %c0_65, %c0_66] : memref<2x32x128xf32, #tpu.memory_space<vmem>>, vector<1x32x128xf32>
    %102 = vector.shape_cast %101 : vector<1x32x128xf32> to vector<32x128xf32>
    %cst_67 = arith.constant dense<0.000000e+00> : vector<2x128xf32>
    %103 = tpu.matmul %100, %102, %cst_67 {dimension_numbers = #tpu.dot_dimension_numbers<[1], [0], [0], [1], [0, 0, 1, 1], [], []>} : vector<2x32xf32>, vector<32x128xf32>, vector<2x128xf32> -> vector<2x128xf32>
    %c0_68 = arith.constant 0 : index
    %c0_69 = arith.constant 0 : index
    %c0_70 = arith.constant 0 : index
    %104 = vector.load %arg11[%c0_68, %c0_69, %c0_70] : memref<2x1x128xf32, #tpu.memory_space<vmem>>, vector<1x1x128xf32>
    %105 = vector.shape_cast %104 : vector<1x1x128xf32> to vector<1x128xf32>
    %106 = vector.broadcast %105 : vector<1x128xf32> to vector<2x128xf32>
    %107 = arith.addf %103, %106 : vector<2x128xf32>
    %cst_71 = arith.constant 0.000000e+00 : f32
    %108 = vector.broadcast %cst_71 : f32 to vector<2x128xf32>
    %109 = arith.maximumf %107, %108 : vector<2x128xf32>
    %c0_72 = arith.constant 0 : index
    %c0_73 = arith.constant 0 : index
    %c0_74 = arith.constant 0 : index
    %110 = vector.load %arg12[%c0_72, %c0_73, %c0_74] : memref<2x128x32xf32, #tpu.memory_space<vmem>>, vector<1x128x32xf32>
    %111 = vector.shape_cast %110 : vector<1x128x32xf32> to vector<128x32xf32>
    %cst_75 = arith.constant dense<0.000000e+00> : vector<2x32xf32>
    %112 = tpu.matmul %109, %111, %cst_75 {dimension_numbers = #tpu.dot_dimension_numbers<[1], [0], [0], [1], [0, 0, 1, 1], [], []>} : vector<2x128xf32>, vector<128x32xf32>, vector<2x32xf32> -> vector<2x32xf32>
    %113 = arith.addf %100, %112 : vector<2x32xf32>
    %c0_76 = arith.constant 0 : index
    %c0_77 = arith.constant 0 : index
    %c0_78 = arith.constant 0 : index
    %114 = vector.load %arg13[%c0_76, %c0_77, %c0_78] : memref<2x1x32xf32, #tpu.memory_space<vmem>>, vector<1x1x32xf32>
    %115 = vector.shape_cast %114 : vector<1x1x32xf32> to vector<1x32xf32>
    %116 = vector.broadcast %115 : vector<1x32xf32> to vector<2x32xf32>
    %117 = arith.addf %113, %116 : vector<2x32xf32>
    %c1_79 = arith.constant 1 : index
    %c0_80 = arith.constant 0 : index
    %c0_81 = arith.constant 0 : index
    %118 = vector.load %arg7[%c1_79, %c0_80, %c0_81] : memref<2x32x32xf32, #tpu.memory_space<vmem>>, vector<1x32x32xf32>
    %119 = vector.shape_cast %118 : vector<1x32x32xf32> to vector<32x32xf32>
    %cst_82 = arith.constant dense<0.000000e+00> : vector<2x32xf32>
    %120 = tpu.matmul %117, %119, %cst_82 {dimension_numbers = #tpu.dot_dimension_numbers<[1], [0], [0], [1], [0, 0, 1, 1], [], []>} : vector<2x32xf32>, vector<32x32xf32>, vector<2x32xf32> -> vector<2x32xf32>
    %c1_83 = arith.constant 1 : index
    %c0_84 = arith.constant 0 : index
    %c0_85 = arith.constant 0 : index
    %121 = vector.load %arg8[%c1_83, %c0_84, %c0_85] : memref<2x32x64xf32, #tpu.memory_space<vmem>>, vector<1x32x64xf32>
    %122 = vector.shape_cast %121 : vector<1x32x64xf32> to vector<32x64xf32>
    %cst_86 = arith.constant dense<0.000000e+00> : vector<32x64xf32>
    %123 = tpu.matmul %69, %122, %cst_86 {dimension_numbers = #tpu.dot_dimension_numbers<[1], [0], [0], [1], [0, 0, 1, 1], [], []>} : vector<32x32xf32>, vector<32x64xf32>, vector<32x64xf32> -> vector<32x64xf32>
    %124 = vector.extract_strided_slice %123 {offsets = [0, 0], sizes = [32, 32], strides = [1, 1]} : vector<32x64xf32> to vector<32x32xf32>
    %125 = vector.extract_strided_slice %123 {offsets = [0, 32], sizes = [32, 32], strides = [1, 1]} : vector<32x64xf32> to vector<32x32xf32>
    %cst_87 = arith.constant dense<0.000000e+00> : vector<32x32xf32>
    %126 = tpu.matmul %4, %120, %cst_87 {dimension_numbers = #tpu.dot_dimension_numbers<[1], [0], [0], [1], [0, 0, 1, 1], [], []>} : vector<32x2xf32>, vector<2x32xf32>, vector<32x32xf32> -> vector<32x32xf32>
    %127 = arith.mulf %126, %124 : vector<32x32xf32>
    %cst_88 = arith.constant dense<0.000000e+00> : vector<32x4xf32>
    %128 = tpu.matmul %127, %5, %cst_88 {dimension_numbers = #tpu.dot_dimension_numbers<[1], [0], [0], [1], [0, 0, 1, 1], [], []>} : vector<32x32xf32>, vector<32x4xf32>, vector<32x4xf32> -> vector<32x4xf32>
    %129 = vector.broadcast %1 : f32 to vector<32x4xf32>
    %130 = arith.mulf %128, %129 : vector<32x4xf32>
    %cst_89 = arith.constant dense<0xFF800000> : vector<4xf32>
    %131 = vector.multi_reduction <maximumf>, %130, %cst_89 [0] : vector<32x4xf32> to vector<4xf32>
    %132 = vector.shape_cast %131 : vector<4xf32> to vector<1x4xf32>
    %133 = vector.broadcast %132 : vector<1x4xf32> to vector<32x4xf32>
    %134 = arith.subf %130, %133 : vector<32x4xf32>
    %135 = math.exp %134 : vector<32x4xf32>
    %cst_90 = arith.constant dense<0.000000e+00> : vector<2x4xf32>
    %136 = tpu.matmul %3, %135, %cst_90 {dimension_numbers = #tpu.dot_dimension_numbers<[1], [0], [0], [1], [0, 0, 1, 1], [], []>} : vector<2x32xf32>, vector<32x4xf32>, vector<2x4xf32> -> vector<2x4xf32>
    %cst_91 = arith.constant dense<0.000000e+00> : vector<32x4xf32>
    %137 = tpu.matmul %4, %136, %cst_91 {dimension_numbers = #tpu.dot_dimension_numbers<[1], [0], [0], [1], [0, 0, 1, 1], [], []>} : vector<32x2xf32>, vector<2x4xf32>, vector<32x4xf32> -> vector<32x4xf32>
    %138 = arith.divf %135, %137 : vector<32x4xf32>
    %cst_92 = arith.constant dense<0.000000e+00> : vector<32x32xf32>
    %139 = tpu.matmul %138, %6, %cst_92 {dimension_numbers = #tpu.dot_dimension_numbers<[1], [0], [0], [1], [0, 0, 1, 1], [], []>} : vector<32x4xf32>, vector<4x32xf32>, vector<32x32xf32> -> vector<32x32xf32>
    %140 = arith.mulf %139, %125 : vector<32x32xf32>
    %cst_93 = arith.constant dense<0.000000e+00> : vector<2x32xf32>
    %141 = tpu.matmul %3, %140, %cst_93 {dimension_numbers = #tpu.dot_dimension_numbers<[1], [0], [0], [1], [0, 0, 1, 1], [], []>} : vector<2x32xf32>, vector<32x32xf32>, vector<2x32xf32> -> vector<2x32xf32>
    %c1_94 = arith.constant 1 : index
    %c0_95 = arith.constant 0 : index
    %c0_96 = arith.constant 0 : index
    %142 = vector.load %arg9[%c1_94, %c0_95, %c0_96] : memref<2x32x32xf32, #tpu.memory_space<vmem>>, vector<1x32x32xf32>
    %143 = vector.shape_cast %142 : vector<1x32x32xf32> to vector<32x32xf32>
    %cst_97 = arith.constant dense<0.000000e+00> : vector<2x32xf32>
    %144 = tpu.matmul %141, %143, %cst_97 {dimension_numbers = #tpu.dot_dimension_numbers<[1], [0], [0], [1], [0, 0, 1, 1], [], []>} : vector<2x32xf32>, vector<32x32xf32>, vector<2x32xf32> -> vector<2x32xf32>
    %145 = arith.addf %117, %144 : vector<2x32xf32>
    %c1_98 = arith.constant 1 : index
    %c0_99 = arith.constant 0 : index
    %c0_100 = arith.constant 0 : index
    %146 = vector.load %arg10[%c1_98, %c0_99, %c0_100] : memref<2x32x128xf32, #tpu.memory_space<vmem>>, vector<1x32x128xf32>
    %147 = vector.shape_cast %146 : vector<1x32x128xf32> to vector<32x128xf32>
    %cst_101 = arith.constant dense<0.000000e+00> : vector<2x128xf32>
    %148 = tpu.matmul %145, %147, %cst_101 {dimension_numbers = #tpu.dot_dimension_numbers<[1], [0], [0], [1], [0, 0, 1, 1], [], []>} : vector<2x32xf32>, vector<32x128xf32>, vector<2x128xf32> -> vector<2x128xf32>
    %c1_102 = arith.constant 1 : index
    %c0_103 = arith.constant 0 : index
    %c0_104 = arith.constant 0 : index
    %149 = vector.load %arg11[%c1_102, %c0_103, %c0_104] : memref<2x1x128xf32, #tpu.memory_space<vmem>>, vector<1x1x128xf32>
    %150 = vector.shape_cast %149 : vector<1x1x128xf32> to vector<1x128xf32>
    %151 = vector.broadcast %150 : vector<1x128xf32> to vector<2x128xf32>
    %152 = arith.addf %148, %151 : vector<2x128xf32>
    %cst_105 = arith.constant 0.000000e+00 : f32
    %153 = vector.broadcast %cst_105 : f32 to vector<2x128xf32>
    %154 = arith.maximumf %152, %153 : vector<2x128xf32>
    %c1_106 = arith.constant 1 : index
    %c0_107 = arith.constant 0 : index
    %c0_108 = arith.constant 0 : index
    %155 = vector.load %arg12[%c1_106, %c0_107, %c0_108] : memref<2x128x32xf32, #tpu.memory_space<vmem>>, vector<1x128x32xf32>
    %156 = vector.shape_cast %155 : vector<1x128x32xf32> to vector<128x32xf32>
    %cst_109 = arith.constant dense<0.000000e+00> : vector<2x32xf32>
    %157 = tpu.matmul %154, %156, %cst_109 {dimension_numbers = #tpu.dot_dimension_numbers<[1], [0], [0], [1], [0, 0, 1, 1], [], []>} : vector<2x128xf32>, vector<128x32xf32>, vector<2x32xf32> -> vector<2x32xf32>
    %158 = arith.addf %145, %157 : vector<2x32xf32>
    %c1_110 = arith.constant 1 : index
    %c0_111 = arith.constant 0 : index
    %c0_112 = arith.constant 0 : index
    %159 = vector.load %arg13[%c1_110, %c0_111, %c0_112] : memref<2x1x32xf32, #tpu.memory_space<vmem>>, vector<1x1x32xf32>
    %160 = vector.shape_cast %159 : vector<1x1x32xf32> to vector<1x32xf32>
    %161 = vector.broadcast %160 : vector<1x32xf32> to vector<2x32xf32>
    %162 = arith.addf %158, %161 : vector<2x32xf32>
    %c0_113 = arith.constant 0 : index
    %c0_114 = arith.constant 0 : index
    %163 = vector.load %arg14[%c0_113, %c0_114] : memref<32x1xf32, #tpu.memory_space<vmem>>, vector<32x1xf32>
    %cst_115 = arith.constant dense<0.000000e+00> : vector<2x1xf32>
    %164 = tpu.matmul %162, %163, %cst_115 {dimension_numbers = #tpu.dot_dimension_numbers<[1], [0], [0], [1], [0, 0, 1, 1], [], []>} : vector<2x32xf32>, vector<32x1xf32>, vector<2x1xf32> -> vector<2x1xf32>
    %c0_116 = arith.constant 0 : index
    %c0_117 = arith.constant 0 : index
    %165 = vector.load %arg15[%c0_116, %c0_117] : memref<1x1xf32, #tpu.memory_space<vmem>>, vector<1x1xf32>
    %166 = vector.broadcast %165 : vector<1x1xf32> to vector<2x1xf32>
    %167 = arith.addf %164, %166 : vector<2x1xf32>
    %168 = vector.shape_cast %167 : vector<2x1xf32> to vector<2x1xf32>
    %169 = vector.broadcast %168 : vector<2x1xf32> to vector<2x128xf32>
    %c0_118 = arith.constant 0 : index
    %c0_119 = arith.constant 0 : index
    %170 = vector.load %arg20[%c0_118, %c0_119] : memref<2x128xf32, #tpu.memory_space<vmem>>, vector<2x128xf32>
    tpu.vector_store %arg20[%c0_118, %c0_119], %169 {strides = array<i32>} : memref<2x128xf32, #tpu.memory_space<vmem>>, vector<2x128xf32>,
    return
  }
  func.func @transform_0(%arg0: i32) -> (i32, i32) {
    %c0_i32 = arith.constant 0 : i32
    %c0_i32_0 = arith.constant 0 : i32
    return %arg0, %c0_i32 : i32, i32
  }
  func.func @transform_1(%arg0: i32) -> (i32, i32) {
    %c0_i32 = arith.constant 0 : i32
    %c0_i32_0 = arith.constant 0 : i32
    %c0_i32_1 = arith.constant 0 : i32
    return %c0_i32, %c0_i32_0 : i32, i32
  }
  func.func @transform_2(%arg0: i32) -> (i32, i32, i32) {
    %c0_i32 = arith.constant 0 : i32
    %c0_i32_0 = arith.constant 0 : i32
    %c0_i32_1 = arith.constant 0 : i32
    %c0_i32_2 = arith.constant 0 : i32
    return %c0_i32, %c0_i32_0, %c0_i32_1 : i32, i32, i32
  }
  func.func @transform_3(%arg0: i32) -> (i32, i32, i32) {
    %c0_i32 = arith.constant 0 : i32
    %c0_i32_0 = arith.constant 0 : i32
    %c0_i32_1 = arith.constant 0 : i32
    %c0_i32_2 = arith.constant 0 : i32
    return %c0_i32, %c0_i32_0, %c0_i32_1 : i32, i32, i32
  }
  func.func @transform_4(%arg0: i32) -> (i32, i32, i32) {
    %c0_i32 = arith.constant 0 : i32
    %c0_i32_0 = arith.constant 0 : i32
    %c0_i32_1 = arith.constant 0 : i32
    %c0_i32_2 = arith.constant 0 : i32
    return %c0_i32, %c0_i32_0, %c0_i32_1 : i32, i32, i32
  }
  func.func @transform_5(%arg0: i32) -> (i32, i32) {
    %c0_i32 = arith.constant 0 : i32
    %c0_i32_0 = arith.constant 0 : i32
    %c0_i32_1 = arith.constant 0 : i32
    return %c0_i32, %c0_i32_0 : i32, i32
  }
  func.func @transform_6(%arg0: i32) -> (i32, i32, i32) {
    %c0_i32 = arith.constant 0 : i32
    %c0_i32_0 = arith.constant 0 : i32
    %c0_i32_1 = arith.constant 0 : i32
    %c0_i32_2 = arith.constant 0 : i32
    return %c0_i32, %c0_i32_0, %c0_i32_1 : i32, i32, i32
  }
  func.func @transform_7(%arg0: i32) -> (i32, i32, i32) {
    %c0_i32 = arith.constant 0 : i32
    %c0_i32_0 = arith.constant 0 : i32
    %c0_i32_1 = arith.constant 0 : i32
    %c0_i32_2 = arith.constant 0 : i32
    return %c0_i32, %c0_i32_0, %c0_i32_1 : i32, i32, i32
  }
  func.func @transform_8(%arg0: i32) -> (i32, i32, i32) {
    %c0_i32 = arith.constant 0 : i32
    %c0_i32_0 = arith.constant 0 : i32
    %c0_i32_1 = arith.constant 0 : i32
    %c0_i32_2 = arith.constant 0 : i32
    return %c0_i32, %c0_i32_0, %c0_i32_1 : i32, i32, i32
  }
  func.func @transform_9(%arg0: i32) -> (i32, i32, i32) {
    %c0_i32 = arith.constant 0 : i32
    %c0_i32_0 = arith.constant 0 : i32
    %c0_i32_1 = arith.constant 0 : i32
    %c0_i32_2 = arith.constant 0 : i32
    return %c0_i32, %c0_i32_0, %c0_i32_1 : i32, i32, i32
  }
  func.func @transform_10(%arg0: i32) -> (i32, i32, i32) {
    %c0_i32 = arith.constant 0 : i32
    %c0_i32_0 = arith.constant 0 : i32
    %c0_i32_1 = arith.constant 0 : i32
    %c0_i32_2 = arith.constant 0 : i32
    return %c0_i32, %c0_i32_0, %c0_i32_1 : i32, i32, i32
  }
  func.func @transform_11(%arg0: i32) -> (i32, i32, i32) {
    %c0_i32 = arith.constant 0 : i32
    %c0_i32_0 = arith.constant 0 : i32
    %c0_i32_1 = arith.constant 0 : i32
    %c0_i32_2 = arith.constant 0 : i32
    return %c0_i32, %c0_i32_0, %c0_i32_1 : i32, i32, i32
  }
  func.func @transform_12(%arg0: i32) -> (i32, i32, i32) {
    %c0_i32 = arith.constant 0 : i32
    %c0_i32_0 = arith.constant 0 : i32
    %c0_i32_1 = arith.constant 0 : i32
    %c0_i32_2 = arith.constant 0 : i32
    return %c0_i32, %c0_i32_0, %c0_i32_1 : i32, i32, i32
  }
  func.func @transform_13(%arg0: i32) -> (i32, i32) {
    %c0_i32 = arith.constant 0 : i32
    %c0_i32_0 = arith.constant 0 : i32
    %c0_i32_1 = arith.constant 0 : i32
    return %c0_i32, %c0_i32_0 : i32, i32
  }
  func.func @transform_14(%arg0: i32) -> (i32, i32) {
    %c0_i32 = arith.constant 0 : i32
    %c0_i32_0 = arith.constant 0 : i32
    %c0_i32_1 = arith.constant 0 : i32
    return %c0_i32, %c0_i32_0 : i32, i32
  }
  func.func @transform_15(%arg0: i32) -> (i32, i32) {
    %c0_i32 = arith.constant 0 : i32
    %c0_i32_0 = arith.constant 0 : i32
    %c0_i32_1 = arith.constant 0 : i32
    return %c0_i32, %c0_i32_0 : i32, i32
  }
  func.func @transform_16(%arg0: i32) -> (i32, i32) {
    %c0_i32 = arith.constant 0 : i32
    %c0_i32_0 = arith.constant 0 : i32
    %c0_i32_1 = arith.constant 0 : i32
    return %c0_i32, %c0_i32_0 : i32, i32
  }
  func.func @transform_17(%arg0: i32) -> (i32, i32) {
    %c0_i32 = arith.constant 0 : i32
    %c0_i32_0 = arith.constant 0 : i32
    %c0_i32_1 = arith.constant 0 : i32
    return %c0_i32, %c0_i32_0 : i32, i32
  }
  func.func @transform_18(%arg0: i32) -> (i32, i32) {
    %c0_i32 = arith.constant 0 : i32
    %c0_i32_0 = arith.constant 0 : i32
    %c0_i32_1 = arith.constant 0 : i32
    return %c0_i32, %c0_i32_0 : i32, i32
  }
  func.func @transform_19(%arg0: i32) -> (i32, i32) {
    %c0_i32 = arith.constant 0 : i32
    %c0_i32_0 = arith.constant 0 : i32
    return %arg0, %c0_i32 : i32, i32
  }
}

</mosaic_0001>

<llo_original>
// kernel: critic_forward.1
$region0: #{critic_forward.1}
  #allocation0 [shape = 'u32[]', space=smem, size = 0x4, offset = 0x4, fixed_abs, tag = 'smem constant byte address 0x4 - core index']
  #allocation1 [shape = 'u32[72,128]{1,0:T(1,128)}', space=vmem, size = 0x9000, scoped, tag = 'internal scratch']
  #allocation2 [shape = 'f32[1,1]{1,0:T(1,128)S(1)}', space=vmem, size = 0x200, scoped, tag = 'scoped memory for critic_forward.1']
  %s0 = inlined_call_operand.vmem [shape: s32[32,4], index: 0, kind: input, shape index: {}]
  %s1 = inlined_call_operand.vmem [shape: f32[8,32], index: 1, kind: input, shape index: {}]
  %s2 = inlined_call_operand.vmem [shape: f32[2,32,32], index: 2, kind: input, shape index: {}]
  %s3 = inlined_call_operand.vmem [shape: f32[2,32,32], index: 3, kind: input, shape index: {}]
  %s4 = inlined_call_operand.vmem [shape: f32[2,1,32], index: 4, kind: input, shape index: {}]
  %s5 = inlined_call_operand.vmem [shape: f32[1,32], index: 5, kind: input, shape index: {}]
  %s6 = inlined_call_operand.vmem [shape: f32[2,32,32], index: 6, kind: input, shape index: {}]
  %s7 = inlined_call_operand.vmem [shape: f32[2,32,64], index: 7, kind: input, shape index: {}]
  %s8 = inlined_call_operand.vmem [shape: f32[2,32,32], index: 8, kind: input, shape index: {}]
  %s9 = inlined_call_operand.vmem [shape: f32[2,32,128], index: 9, kind: input, shape index: {}]
  %s10 = inlined_call_operand.vmem [shape: f32[2,1,128], index: 10, kind: input, shape index: {}]
  %s11 = inlined_call_operand.vmem [shape: f32[2,128,32], index: 11, kind: input, shape index: {}]
  %s12 = inlined_call_operand.vmem [shape: f32[2,1,32], index: 12, kind: input, shape index: {}]
  %s13 = inlined_call_operand.vmem [shape: f32[32,1], index: 13, kind: input, shape index: {}]
  %s14 = inlined_call_operand.<no memory space> [shape: f32[1,1], index: 14, kind: input, shape index: {}]
  %s15 = inlined_call_operand.vmem [shape: f32[32,4], index: 15, kind: input, shape index: {}]
  %s16 = inlined_call_operand.vmem [shape: f32[4,32], index: 16, kind: input, shape index: {}]
  %s17 = inlined_call_operand.vmem [shape: f32[2,32], index: 17, kind: input, shape index: {}]
  %s18 = inlined_call_operand.vmem [shape: f32[32,2], index: 18, kind: input, shape index: {}]
  %s19 = inlined_call_operand.vmem [shape: f32[2,128], index: 19, kind: output, shape index: {}]
  %s20 = sld [smem:[#allocation0]]
  $region86: #{critic_forward.1} parent=0
    _
  %s22 = ssub.s32 1, %s20
  %s23 = scalar_select 0, %s22, %s20
  %v24 = vstv %s14
  %25 = vst [vmem:[#allocation2] sm:$0x1] %v24
  // Predicated region
  $region2: #{critic_forward.1} parent=0 // pred_check
    _
  $region3: #{critic_forward.1} parent=0 // pred_check_branch
    %27 = sbr.rel (0) target = $region5
  $region4: #{critic_forward.1} parent=0 // pred_region
    _
  $region5: #{critic_forward.1} parent=0 // pred_fallthru
    _
  // Predicated region
  $region6: #{critic_forward.1} parent=0 // pred_check
    _
  $region7: #{critic_forward.1} parent=0 // pred_check_branch
    %29 = sbr.rel (0) target = $region9
  $region8: #{critic_forward.1} parent=0 // pred_region
    _
  $region9: #{critic_forward.1} parent=0 // pred_fallthru
    _
  // Predicated region
  $region10: #{critic_forward.1} parent=0 // pred_check
    _
  $region11: #{critic_forward.1} parent=0 // pred_check_branch
    %31 = sbr.rel (0) target = $region13
  $region12: #{critic_forward.1} parent=0 // pred_region
    _
  $region13: #{critic_forward.1} parent=0 // pred_fallthru
    _
  // Predicated region
  $region14: #{critic_forward.1} parent=0 // pred_check
    _
  $region15: #{critic_forward.1} parent=0 // pred_check_branch
    %33 = sbr.rel (0) target = $region17
  $region16: #{critic_forward.1} parent=0 // pred_region
    _
  $region17: #{critic_forward.1} parent=0 // pred_fallthru
    _
  // Predicated region
  $region18: #{critic_forward.1} parent=0 // pred_check
    _
  $region19: #{critic_forward.1} parent=0 // pred_check_branch
    %35 = sbr.rel (0) target = $region21
  $region20: #{critic_forward.1} parent=0 // pred_region
    _
  $region21: #{critic_forward.1} parent=0 // pred_fallthru
    _
  // Predicated region
  $region22: #{critic_forward.1} parent=0 // pred_check
    _
  $region23: #{critic_forward.1} parent=0 // pred_check_branch
    %37 = sbr.rel (0) target = $region25
  $region24: #{critic_forward.1} parent=0 // pred_region
    _
  $region25: #{critic_forward.1} parent=0 // pred_fallthru
    _
  // Predicated region
  $region26: #{critic_forward.1} parent=0 // pred_check
    _
  $region27: #{critic_forward.1} parent=0 // pred_check_branch
    %39 = sbr.rel (0) target = $region29
  $region28: #{critic_forward.1} parent=0 // pred_region
    _
  $region29: #{critic_forward.1} parent=0 // pred_fallthru
    _
  // Predicated region
  $region30: #{critic_forward.1} parent=0 // pred_check
    _
  $region31: #{critic_forward.1} parent=0 // pred_check_branch
    %41 = sbr.rel (0) target = $region33
  $region32: #{critic_forward.1} parent=0 // pred_region
    _
  $region33: #{critic_forward.1} parent=0 // pred_fallthru
    _
  // Predicated region
  $region34: #{critic_forward.1} parent=0 // pred_check
    _
  $region35: #{critic_forward.1} parent=0 // pred_check_branch
    %43 = sbr.rel (0) target = $region37
  $region36: #{critic_forward.1} parent=0 // pred_region
    _
  $region37: #{critic_forward.1} parent=0 // pred_fallthru
    _
  // Predicated region
  $region38: #{critic_forward.1} parent=0 // pred_check
    _
  $region39: #{critic_forward.1} parent=0 // pred_check_branch
    %45 = sbr.rel (0) target = $region41
  $region40: #{critic_forward.1} parent=0 // pred_region
    _
  $region41: #{critic_forward.1} parent=0 // pred_fallthru
    _
  // Predicated region
  $region42: #{critic_forward.1} parent=0 // pred_check
    _
  $region43: #{critic_forward.1} parent=0 // pred_check_branch
    %47 = sbr.rel (0) target = $region45
  $region44: #{critic_forward.1} parent=0 // pred_region
    _
  $region45: #{critic_forward.1} parent=0 // pred_fallthru
    _
  // Predicated region
  $region46: #{critic_forward.1} parent=0 // pred_check
    _
  $region47: #{critic_forward.1} parent=0 // pred_check_branch
    %49 = sbr.rel (0) target = $region49
  $region48: #{critic_forward.1} parent=0 // pred_region
    _
  $region49: #{critic_forward.1} parent=0 // pred_fallthru
    _
  // Predicated region
  $region50: #{critic_forward.1} parent=0 // pred_check
    _
  $region51: #{critic_forward.1} parent=0 // pred_check_branch
    %51 = sbr.rel (0) target = $region53
  $region52: #{critic_forward.1} parent=0 // pred_region
    _
  $region53: #{critic_forward.1} parent=0 // pred_fallthru
    _
  // Predicated region
  $region54: #{critic_forward.1} parent=0 // pred_check
    _
  $region55: #{critic_forward.1} parent=0 // pred_check_branch
    %53 = sbr.rel (0) target = $region57
  $region56: #{critic_forward.1} parent=0 // pred_region
    _
  $region57: #{critic_forward.1} parent=0 // pred_fallthru
    _
  // Predicated region
  $region58: #{critic_forward.1} parent=0 // pred_check
    _
  $region59: #{critic_forward.1} parent=0 // pred_check_branch
    %55 = sbr.rel (0) target = $region61
  $region60: #{critic_forward.1} parent=0 // pred_region
    _
  $region61: #{critic_forward.1} parent=0 // pred_fallthru
    _
  // Predicated region
  $region62: #{critic_forward.1} parent=0 // pred_check
    _
  $region63: #{critic_forward.1} parent=0 // pred_check_branch
    %57 = sbr.rel (0) target = $region65
  $region64: #{critic_forward.1} parent=0 // pred_region
    _
  $region65: #{critic_forward.1} parent=0 // pred_fallthru
    _
  // Predicated region
  $region66: #{critic_forward.1} parent=0 // pred_check
    _
  $region67: #{critic_forward.1} parent=0 // pred_check_branch
    %59 = sbr.rel (0) target = $region69
  $region68: #{critic_forward.1} parent=0 // pred_region
    _
  $region69: #{critic_forward.1} parent=0 // pred_fallthru
    _
  // Predicated region
  $region70: #{critic_forward.1} parent=0 // pred_check
    _
  $region71: #{critic_forward.1} parent=0 // pred_check_branch
    %61 = sbr.rel (0) target = $region73
  $region72: #{critic_forward.1} parent=0 // pred_region
    _
  $region73: #{critic_forward.1} parent=0 // pred_fallthru
    _
  // Predicated region
  $region74: #{critic_forward.1} parent=0 // pred_check
    _
  $region75: #{critic_forward.1} parent=0 // pred_check_branch
    %63 = sbr.rel (0) target = $region77
  $region76: #{critic_forward.1} parent=0 // pred_region
    _
  $region77: #{critic_forward.1} parent=0 // pred_fallthru
    _
  %v64 = vld [vmem:[%s17] sm:$0x3]
  %v65 = vld [vmem:[%s18] sm:$0xff]
  %v66 = vld [vmem:[%s18 + $0x8] sm:$0xff]
  %v67 = vld [vmem:[%s18 + $0x10] sm:$0xff]
  %v68 = vld [vmem:[%s18 + $0x18] sm:$0xff]
  %v69 = vld [vmem:[%s15] sm:$0xff]
  %v70 = vld [vmem:[%s15 + $0x8] sm:$0xff]
  %v71 = vld [vmem:[%s15 + $0x10] sm:$0xff]
  %v72 = vld [vmem:[%s15 + $0x18] sm:$0xff]
  %v73 = vld [vmem:[%s16] sm:$0xf]
  %v74 = vld [vmem:[%s0] sm:$0xff]
  %v75 = vld [vmem:[%s0 + $0x8] sm:$0xff]
  %v76 = vld [vmem:[%s0 + $0x10] sm:$0xff]
  %v77 = vld [vmem:[%s0 + $0x18] sm:$0xff]
  %v78 = vlaneseq
  %v79 = vand.u32 %v78, 127
  %80 = vset.pattern.permute.xlu0 0
  %81 = vperm.xlu0 %80, %v74
  %v82 = vpop.permute.xlu0 %81
  %83 = vset.pattern.permute.xlu0 0
  %84 = vperm.xlu0 %83, %v75
  %v85 = vpop.permute.xlu0 %84
  %86 = vset.pattern.permute.xlu0 0
  %87 = vperm.xlu0 %86, %v76
  %v88 = vpop.permute.xlu0 %87
  %89 = vset.pattern.permute.xlu0 0
  %90 = vperm.xlu0 %89, %v77
  %v91 = vpop.permute.xlu0 %90
  %vm92 = vcmp.eq.s32.totalorder %v82, %v79
  %vm93 = vcmp.eq.s32.totalorder %v85, %v79
  %vm94 = vcmp.eq.s32.totalorder %v88, %v79
  %vm95 = vcmp.eq.s32.totalorder %v91, %v79
  %v96 = vsel %vm92, 1, 0
  %v97 = vsel %vm93, 1, 0
  %v98 = vsel %vm94, 1, 0
  %v99 = vsel %vm95, 1, 0
  %v100 = vcvt.s32.f32 %v96
  %v101 = vcvt.s32.f32 %v97
  %v102 = vcvt.s32.f32 %v98
  %v103 = vcvt.s32.f32 %v99
  %v104 = vadd.f32 %v100, 0.0
  %v105 = vadd.f32 %v101, 0.0
  %v106 = vadd.f32 %v102, 0.0
  %v107 = vadd.f32 %v103, 0.0
  %108 = vset.pattern.permute.xlu0 1
  %109 = vperm.xlu0 %108, %v74
  %v110 = vpop.permute.xlu0 %109
  %111 = vset.pattern.permute.xlu0 1
  %112 = vperm.xlu0 %111, %v75
  %v113 = vpop.permute.xlu0 %112
  %114 = vset.pattern.permute.xlu0 1
  %115 = vperm.xlu0 %114, %v76
  %v116 = vpop.permute.xlu0 %115
  %117 = vset.pattern.permute.xlu0 1
  %118 = vperm.xlu0 %117, %v77
  %v119 = vpop.permute.xlu0 %118
  %vm120 = vcmp.eq.s32.totalorder %v110, %v79
  %vm121 = vcmp.eq.s32.totalorder %v113, %v79
  %vm122 = vcmp.eq.s32.totalorder %v116, %v79
  %vm123 = vcmp.eq.s32.totalorder %v119, %v79
  %v124 = vsel %vm120, 1, 0
  %v125 = vsel %vm121, 1, 0
  %v126 = vsel %vm122, 1, 0
  %v127 = vsel %vm123, 1, 0
  %v128 = vcvt.s32.f32 %v124
  %v129 = vcvt.s32.f32 %v125
  %v130 = vcvt.s32.f32 %v126
  %v131 = vcvt.s32.f32 %v127
  %v132 = vadd.f32 %v104, %v128
  %v133 = vadd.f32 %v105, %v129
  %v134 = vadd.f32 %v106, %v130
  %v135 = vadd.f32 %v107, %v131
  %136 = vset.pattern.permute.xlu0 2
  %137 = vperm.xlu0 %136, %v74
  %v138 = vpop.permute.xlu0 %137
  %139 = vset.pattern.permute.xlu0 2
  %140 = vperm.xlu0 %139, %v75
  %v141 = vpop.permute.xlu0 %140
  %142 = vset.pattern.permute.xlu0 2
  %143 = vperm.xlu0 %142, %v76
  %v144 = vpop.permute.xlu0 %143
  %145 = vset.pattern.permute.xlu0 2
  %146 = vperm.xlu0 %145, %v77
  %v147 = vpop.permute.xlu0 %146
  %vm148 = vcmp.eq.s32.totalorder %v138, %v79
  %vm149 = vcmp.eq.s32.totalorder %v141, %v79
  %vm150 = vcmp.eq.s32.totalorder %v144, %v79
  %vm151 = vcmp.eq.s32.totalorder %v147, %v79
  %v152 = vsel %vm148, 1, 0
  %v153 = vsel %vm149, 1, 0
  %v154 = vsel %vm150, 1, 0
  %v155 = vsel %vm151, 1, 0
  %v156 = vcvt.s32.f32 %v152
  %v157 = vcvt.s32.f32 %v153
  %v158 = vcvt.s32.f32 %v154
  %v159 = vcvt.s32.f32 %v155
  %v160 = vadd.f32 %v132, %v156
  %v161 = vadd.f32 %v133, %v157
  %v162 = vadd.f32 %v134, %v158
  %v163 = vadd.f32 %v135, %v159
  %164 = vset.pattern.permute.xlu0 3
  %165 = vperm.xlu0 %164, %v74
  %v166 = vpop.permute.xlu0 %165
  %167 = vset.pattern.permute.xlu0 3
  %168 = vperm.xlu0 %167, %v75
  %v169 = vpop.permute.xlu0 %168
  %170 = vset.pattern.permute.xlu0 3
  %171 = vperm.xlu0 %170, %v76
  %v172 = vpop.permute.xlu0 %171
  %173 = vset.pattern.permute.xlu0 3
  %174 = vperm.xlu0 %173, %v77
  %v175 = vpop.permute.xlu0 %174
  %vm176 = vcmp.eq.s32.totalorder %v166, %v79
  %vm177 = vcmp.eq.s32.totalorder %v169, %v79
  %vm178 = vcmp.eq.s32.totalorder %v172, %v79
  %vm179 = vcmp.eq.s32.totalorder %v175, %v79
  %v180 = vsel %vm176, 1, 0
  %v181 = vsel %vm177, 1, 0
  %v182 = vsel %vm178, 1, 0
  %v183 = vsel %vm179, 1, 0
  %v184 = vcvt.s32.f32 %v180
  %v185 = vcvt.s32.f32 %v181
  %v186 = vcvt.s32.f32 %v182
  %v187 = vcvt.s32.f32 %v183
  %v188 = vadd.f32 %v160, %v184
  %v189 = vadd.f32 %v161, %v185
  %v190 = vadd.f32 %v162, %v186
  %v191 = vadd.f32 %v163, %v187
  %v192 = vld [vmem:[%s1] sm:$0xff]
  %vm193 = vcmask 64512
  %v195 = vsel %vm193, %v188, 0
  %v198 = vsel %vm193, %v189, 0
  %v201 = vsel %vm193, %v190, 0
  %v204 = vsel %vm193, %v191, 0
  %206 = vmatpush.msra.mxu0 0.0
  %207 = vmatpush.msra.mxu0 0.0
  %208 = vmatpush.msra.mxu0 0.0
  %209 = vmatpush.msra.mxu0 0.0
  %210 = vmatpush.msra.mxu0 0.0
  %211 = vmatpush.msra.mxu0 0.0
  %212 = vmatpush.msra.mxu0 0.0
  %213 = vmatpush.msra.mxu0 0.0
  %214 = vmatpush.msra.mxu0 0.0
  %215 = vmatpush.msra.mxu0 0.0
  %216 = vmatpush.msra.mxu0 0.0
  %217 = vmatpush.msra.mxu0 0.0
  %218 = vmatpush.msra.mxu0 0.0
  %219 = vmatpush.msra.mxu0 0.0
  %220 = vmatpush.msra.mxu0 0.0
  %221 = vmatpush.msra.mxu0 %v192
  %222 = vmatmul.f32.gmra.mxu0 %v195
  %v223 = vpop.f32.mrf.mxu0
  %v224 = vadd.f32 0.0, %v223
  %225 = vmatmul.f32.gmra.mxu0 %v198
  %v226 = vpop.f32.mrf.mxu0
  %v227 = vadd.f32 0.0, %v226
  %228 = vmatmul.f32.gmra.mxu0 %v201
  %v229 = vpop.f32.mrf.mxu0
  %v230 = vadd.f32 0.0, %v229
  %231 = vmatmul.f32.gmra.mxu0 %v204
  %v232 = vpop.f32.mrf.mxu0
  %v233 = vadd.f32 0.0, %v232
  %234 = vdwg.mxu0
  %vm235 = vcmask 261120
  %v237 = vsel %vm235, %v64, 0
  %239 = vmatpush.msra.mxu0 0.0
  %240 = vmatpush.msra.mxu0 0.0
  %241 = vmatpush.msra.mxu0 0.0
  %242 = vmatpush.msra.mxu0 0.0
  %243 = vmatpush.msra.mxu0 0.0
  %244 = vmatpush.msra.mxu0 0.0
  %245 = vmatpush.msra.mxu0 0.0
  %246 = vmatpush.msra.mxu0 0.0
  %247 = vmatpush.msra.mxu0 0.0
  %248 = vmatpush.msra.mxu0 0.0
  %249 = vmatpush.msra.mxu0 0.0
  %250 = vmatpush.msra.mxu0 0.0
  %251 = vmatpush.msra.mxu0 %v233
  %252 = vmatpush.msra.mxu0 %v230
  %253 = vmatpush.msra.mxu0 %v227
  %254 = vmatpush.msra.mxu0 %v224
  %255 = vmatmul.f32.gmra.mxu0 %v237
  %v256 = vpop.f32.mrf.mxu0
  %v257 = vadd.f32 0.0, %v256
  %258 = vdwg.mxu0
  %v259 = vmul.f32 %v257, 0.0625
  %v260 = vld [vmem:[%s3] sm:$0xff]
  %v261 = vld [vmem:[%s3 + $0x8] sm:$0xff]
  %v262 = vld [vmem:[%s3 + $0x10] sm:$0xff]
  %v263 = vld [vmem:[%s3 + $0x18] sm:$0xff]
  %v265 = vsel %vm235, %v259, 0
  %267 = vmatpush.msra.mxu0 0.0
  %268 = vmatpush.msra.mxu0 0.0
  %269 = vmatpush.msra.mxu0 0.0
  %270 = vmatpush.msra.mxu0 0.0
  %271 = vmatpush.msra.mxu0 0.0
  %272 = vmatpush.msra.mxu0 0.0
  %273 = vmatpush.msra.mxu0 0.0
  %274 = vmatpush.msra.mxu0 0.0
  %275 = vmatpush.msra.mxu0 0.0
  %276 = vmatpush.msra.mxu0 0.0
  %277 = vmatpush.msra.mxu0 0.0
  %278 = vmatpush.msra.mxu0 0.0
  %279 = vmatpush.msra.mxu0 %v263
  %280 = vmatpush.msra.mxu0 %v262
  %281 = vmatpush.msra.mxu0 %v261
  %282 = vmatpush.msra.mxu0 %v260
  %283 = vmatmul.f32.gmra.mxu0 %v265
  %v284 = vpop.f32.mrf.mxu0
  %v285 = vadd.f32 0.0, %v284
  %286 = vdwg.mxu0
  %v287 = vld [vmem:[%s2] sm:$0xff]
  %v288 = vld [vmem:[%s2 + $0x8] sm:$0xff]
  %v289 = vld [vmem:[%s2 + $0x10] sm:$0xff]
  %v290 = vld [vmem:[%s2 + $0x18] sm:$0xff]
  %vm291 = vcmask 15360
  %v293 = vsel %vm291, %v65, 0
  %v296 = vsel %vm291, %v66, 0
  %v299 = vsel %vm291, %v67, 0
  %v302 = vsel %vm291, %v68, 0
  %vm304 = vcmask 1041408
  %v306 = vsel %vm304, %v285, 0
  %308 = vmatpush.msra.mxu0 0.0
  %309 = vmatpush.msra.mxu0 0.0
  %310 = vmatpush.msra.mxu0 0.0
  %311 = vmatpush.msra.mxu0 0.0
  %312 = vmatpush.msra.mxu0 0.0
  %313 = vmatpush.msra.mxu0 0.0
  %314 = vmatpush.msra.mxu0 0.0
  %315 = vmatpush.msra.mxu0 0.0
  %316 = vmatpush.msra.mxu0 0.0
  %317 = vmatpush.msra.mxu0 0.0
  %318 = vmatpush.msra.mxu0 0.0
  %319 = vmatpush.msra.mxu0 0.0
  %320 = vmatpush.msra.mxu0 0.0
  %321 = vmatpush.msra.mxu0 0.0
  %322 = vmatpush.msra.mxu0 0.0
  %323 = vmatpush.msra.mxu0 %v306
  %324 = vmatmul.f32.gmra.mxu0 %v293
  %v325 = vpop.f32.mrf.mxu0
  %v326 = vadd.f32 0.0, %v325
  %327 = vmatmul.f32.gmra.mxu0 %v296
  %v328 = vpop.f32.mrf.mxu0
  %v329 = vadd.f32 0.0, %v328
  %330 = vmatmul.f32.gmra.mxu0 %v299
  %v331 = vpop.f32.mrf.mxu0
  %v332 = vadd.f32 0.0, %v331
  %333 = vmatmul.f32.gmra.mxu0 %v302
  %v334 = vpop.f32.mrf.mxu0
  %v335 = vadd.f32 0.0, %v334
  %336 = vdwg.mxu0
  %v338 = vsel %vm235, %v224, 0
  %v341 = vsel %vm235, %v227, 0
  %v344 = vsel %vm235, %v230, 0
  %v347 = vsel %vm235, %v233, 0
  %349 = vmatpush.msra.mxu0 0.0
  %350 = vmatpush.msra.mxu0 0.0
  %351 = vmatpush.msra.mxu0 0.0
  %352 = vmatpush.msra.mxu0 0.0
  %353 = vmatpush.msra.mxu0 0.0
  %354 = vmatpush.msra.mxu0 0.0
  %355 = vmatpush.msra.mxu0 0.0
  %356 = vmatpush.msra.mxu0 0.0
  %357 = vmatpush.msra.mxu0 0.0
  %358 = vmatpush.msra.mxu0 0.0
  %359 = vmatpush.msra.mxu0 0.0
  %360 = vmatpush.msra.mxu0 0.0
  %361 = vmatpush.msra.mxu0 %v290
  %362 = vmatpush.msra.mxu0 %v289
  %363 = vmatpush.msra.mxu0 %v288
  %364 = vmatpush.msra.mxu0 %v287
  %365 = vmatmul.f32.gmra.mxu0 %v338
  %v366 = vpop.f32.mrf.mxu0
  %v367 = vadd.f32 %v326, %v366
  %368 = vmatmul.f32.gmra.mxu0 %v341
  %v369 = vpop.f32.mrf.mxu0
  %v370 = vadd.f32 %v329, %v369
  %371 = vmatmul.f32.gmra.mxu0 %v344
  %v372 = vpop.f32.mrf.mxu0
  %v373 = vadd.f32 %v332, %v372
  %374 = vmatmul.f32.gmra.mxu0 %v347
  %v375 = vpop.f32.mrf.mxu0
  %v376 = vadd.f32 %v335, %v375
  %377 = vdwg.mxu0
  %v378 = vld [vmem:[%s4] sm:$0x1]
  %v380 = vperm.slane %v378, 0
  %v382 = vadd.f32 %v367, %v380
  %v383 = vadd.f32 %v370, %v380
  %v384 = vadd.f32 %v373, %v380
  %v385 = vadd.f32 %v376, %v380
  %v386 = vmax.f32 %v382, 0.0
  %v387 = vmax.f32 %v383, 0.0
  %v388 = vmax.f32 %v384, 0.0
  %v389 = vmax.f32 %v385, 0.0
  %390 = vmatpush.msra.mxu0 0.0
  %391 = vmatpush.msra.mxu0 0.0
  %392 = vmatpush.msra.mxu0 0.0
  %393 = vmatpush.msra.mxu0 0.0
  %394 = vmatpush.msra.mxu0 0.0
  %395 = vmatpush.msra.mxu0 0.0
  %396 = vmatpush.msra.mxu0 0.0
  %397 = vmatpush.msra.mxu0 0.0
  %398 = vmatpush.msra.mxu0 0.0
  %399 = vmatpush.msra.mxu0 0.0
  %400 = vmatpush.msra.mxu0 0.0
  %401 = vmatpush.msra.mxu0 0.0
  %402 = vmatpush.msra.mxu0 %v389
  %403 = vmatpush.msra.mxu0 %v388
  %404 = vmatpush.msra.mxu0 %v387
  %405 = vmatpush.msra.mxu0 %v386
  %406 = vmatmul.f32.gmra.mxu0 %v237
  %v407 = vpop.f32.mrf.mxu0
  %v408 = vadd.f32 0.0, %v407
  %409 = vdwg.mxu0
  %v410 = vmul.f32 %v408, 0.0625
  %s411 = scalar_lea.vmem %s3, 32
  %v412 = vld [vmem:[%s411] sm:$0xff]
  %v413 = vld [vmem:[%s411 + $0x8] sm:$0xff]
  %v414 = vld [vmem:[%s411 + $0x10] sm:$0xff]
  %v415 = vld [vmem:[%s411 + $0x18] sm:$0xff]
  %v417 = vsel %vm235, %v410, 0
  %419 = vmatpush.msra.mxu0 0.0
  %420 = vmatpush.msra.mxu0 0.0
  %421 = vmatpush.msra.mxu0 0.0
  %422 = vmatpush.msra.mxu0 0.0
  %423 = vmatpush.msra.mxu0 0.0
  %424 = vmatpush.msra.mxu0 0.0
  %425 = vmatpush.msra.mxu0 0.0
  %426 = vmatpush.msra.mxu0 0.0
  %427 = vmatpush.msra.mxu0 0.0
  %428 = vmatpush.msra.mxu0 0.0
  %429 = vmatpush.msra.mxu0 0.0
  %430 = vmatpush.msra.mxu0 0.0
  %431 = vmatpush.msra.mxu0 %v415
  %432 = vmatpush.msra.mxu0 %v414
  %433 = vmatpush.msra.mxu0 %v413
  %434 = vmatpush.msra.mxu0 %v412
  %435 = vmatmul.f32.gmra.mxu0 %v417
  %v436 = vpop.f32.mrf.mxu0
  %v437 = vadd.f32 0.0, %v436
  %438 = vdwg.mxu0
  %s439 = scalar_lea.vmem %s2, 32
  %v440 = vld [vmem:[%s439] sm:$0xff]
  %v441 = vld [vmem:[%s439 + $0x8] sm:$0xff]
  %v442 = vld [vmem:[%s439 + $0x10] sm:$0xff]
  %v443 = vld [vmem:[%s439 + $0x18] sm:$0xff]
  %v445 = vsel %vm304, %v437, 0
  %447 = vmatpush.msra.mxu0 0.0
  %448 = vmatpush.msra.mxu0 0.0
  %449 = vmatpush.msra.mxu0 0.0
  %450 = vmatpush.msra.mxu0 0.0
  %451 = vmatpush.msra.mxu0 0.0
  %452 = vmatpush.msra.mxu0 0.0
  %453 = vmatpush.msra.mxu0 0.0
  %454 = vmatpush.msra.mxu0 0.0
  %455 = vmatpush.msra.mxu0 0.0
  %456 = vmatpush.msra.mxu0 0.0
  %457 = vmatpush.msra.mxu0 0.0
  %458 = vmatpush.msra.mxu0 0.0
  %459 = vmatpush.msra.mxu0 0.0
  %460 = vmatpush.msra.mxu0 0.0
  %461 = vmatpush.msra.mxu0 0.0
  %462 = vmatpush.msra.mxu0 %v445
  %463 = vmatmul.f32.gmra.mxu0 %v293
  %v464 = vpop.f32.mrf.mxu0
  %v465 = vadd.f32 0.0, %v464
  %466 = vmatmul.f32.gmra.mxu0 %v296
  %v467 = vpop.f32.mrf.mxu0
  %v468 = vadd.f32 0.0, %v467
  %469 = vmatmul.f32.gmra.mxu0 %v299
  %v470 = vpop.f32.mrf.mxu0
  %v471 = vadd.f32 0.0, %v470
  %472 = vmatmul.f32.gmra.mxu0 %v302
  %v473 = vpop.f32.mrf.mxu0
  %v474 = vadd.f32 0.0, %v473
  %475 = vdwg.mxu0
  %v477 = vsel %vm235, %v386, 0
  %v480 = vsel %vm235, %v387, 0
  %v483 = vsel %vm235, %v388, 0
  %v486 = vsel %vm235, %v389, 0
  %488 = vmatpush.msra.mxu0 0.0
  %489 = vmatpush.msra.mxu0 0.0
  %490 = vmatpush.msra.mxu0 0.0
  %491 = vmatpush.msra.mxu0 0.0
  %492 = vmatpush.msra.mxu0 0.0
  %493 = vmatpush.msra.mxu0 0.0
  %494 = vmatpush.msra.mxu0 0.0
  %495 = vmatpush.msra.mxu0 0.0
  %496 = vmatpush.msra.mxu0 0.0
  %497 = vmatpush.msra.mxu0 0.0
  %498 = vmatpush.msra.mxu0 0.0
  %499 = vmatpush.msra.mxu0 0.0
  %500 = vmatpush.msra.mxu0 %v443
  %501 = vmatpush.msra.mxu0 %v442
  %502 = vmatpush.msra.mxu0 %v441
  %503 = vmatpush.msra.mxu0 %v440
  %504 = vmatmul.f32.gmra.mxu0 %v477
  %v505 = vpop.f32.mrf.mxu0
  %v506 = vadd.f32 %v465, %v505
  %507 = vmatmul.f32.gmra.mxu0 %v480
  %v508 = vpop.f32.mrf.mxu0
  %v509 = vadd.f32 %v468, %v508
  %510 = vmatmul.f32.gmra.mxu0 %v483
  %v511 = vpop.f32.mrf.mxu0
  %v512 = vadd.f32 %v471, %v511
  %513 = vmatmul.f32.gmra.mxu0 %v486
  %v514 = vpop.f32.mrf.mxu0
  %v515 = vadd.f32 %v474, %v514
  %516 = vdwg.mxu0
  %s517 = scalar_lea.vmem %s4, 1
  %v518 = vld [vmem:[%s517] sm:$0x1]
  %v520 = vperm.slane %v518, 0
  %v522 = vadd.f32 %v506, %v520
  %v523 = vadd.f32 %v509, %v520
  %v524 = vadd.f32 %v512, %v520
  %v525 = vadd.f32 %v515, %v520
  %v526 = vmax.f32 %v522, 0.0
  %v527 = vmax.f32 %v523, 0.0
  %v528 = vmax.f32 %v524, 0.0
  %v529 = vmax.f32 %v525, 0.0
  %v530 = vld [vmem:[%s5] sm:$0x1]
  %v532 = vperm.slane %v530, 0
  %v534 = vld [vmem:[%s6] sm:$0xff]
  %v535 = vld [vmem:[%s6 + $0x8] sm:$0xff]
  %v536 = vld [vmem:[%s6 + $0x10] sm:$0xff]
  %v537 = vld [vmem:[%s6 + $0x18] sm:$0xff]
  %v538 = vsel %vm235, %v532, 0
  %540 = vmatpush.msra.mxu0 0.0
  %541 = vmatpush.msra.mxu0 0.0
  %542 = vmatpush.msra.mxu0 0.0
  %543 = vmatpush.msra.mxu0 0.0
  %544 = vmatpush.msra.mxu0 0.0
  %545 = vmatpush.msra.mxu0 0.0
  %546 = vmatpush.msra.mxu0 0.0
  %547 = vmatpush.msra.mxu0 0.0
  %548 = vmatpush.msra.mxu0 0.0
  %549 = vmatpush.msra.mxu0 0.0
  %550 = vmatpush.msra.mxu0 0.0
  %551 = vmatpush.msra.mxu0 0.0
  %552 = vmatpush.msra.mxu0 %v537
  %553 = vmatpush.msra.mxu0 %v536
  %554 = vmatpush.msra.mxu0 %v535
  %555 = vmatpush.msra.mxu0 %v534
  %556 = vmatmul.f32.gmra.mxu0 %v538
  %v557 = vpop.f32.mrf.mxu0
  %v558 = vadd.f32 0.0, %v557
  %559 = vdwg.mxu0
  %v560 = vld [vmem:[%s7] sm:$0xff]
  %v561 = vld [vmem:[%s7 + $0x8] sm:$0xff]
  %v562 = vld [vmem:[%s7 + $0x10] sm:$0xff]
  %v563 = vld [vmem:[%s7 + $0x18] sm:$0xff]
  %v565 = vsel %vm235, %v526, 0
  %v568 = vsel %vm235, %v527, 0
  %v571 = vsel %vm235, %v528, 0
  %v574 = vsel %vm235, %v529, 0
  %576 = vmatpush.msra.mxu0 0.0
  %577 = vmatpush.msra.mxu0 0.0
  %578 = vmatpush.msra.mxu0 0.0
  %579 = vmatpush.msra.mxu0 0.0
  %580 = vmatpush.msra.mxu0 0.0
  %581 = vmatpush.msra.mxu0 0.0
  %582 = vmatpush.msra.mxu0 0.0
  %583 = vmatpush.msra.mxu0 0.0
  %584 = vmatpush.msra.mxu0 0.0
  %585 = vmatpush.msra.mxu0 0.0
  %586 = vmatpush.msra.mxu0 0.0
  %587 = vmatpush.msra.mxu0 0.0
  %588 = vmatpush.msra.mxu0 %v563
  %589 = vmatpush.msra.mxu0 %v562
  %590 = vmatpush.msra.mxu0 %v561
  %591 = vmatpush.msra.mxu0 %v560
  %592 = vmatmul.f32.gmra.mxu0 %v565
  %v593 = vpop.f32.mrf.mxu0
  %v594 = vadd.f32 0.0, %v593
  %595 = vmatmul.f32.gmra.mxu0 %v568
  %v596 = vpop.f32.mrf.mxu0
  %v597 = vadd.f32 0.0, %v596
  %598 = vmatmul.f32.gmra.mxu0 %v571
  %v599 = vpop.f32.mrf.mxu0
  %v600 = vadd.f32 0.0, %v599
  %601 = vmatmul.f32.gmra.mxu0 %v574
  %v602 = vpop.f32.mrf.mxu0
  %v603 = vadd.f32 0.0, %v602
  %604 = vdwg.mxu0
  %v606 = vsel %vm304, %v558, 0
  %608 = vmatpush.msra.mxu0 0.0
  %609 = vmatpush.msra.mxu0 0.0
  %610 = vmatpush.msra.mxu0 0.0
  %611 = vmatpush.msra.mxu0 0.0
  %612 = vmatpush.msra.mxu0 0.0
  %613 = vmatpush.msra.mxu0 0.0
  %614 = vmatpush.msra.mxu0 0.0
  %615 = vmatpush.msra.mxu0 0.0
  %616 = vmatpush.msra.mxu0 0.0
  %617 = vmatpush.msra.mxu0 0.0
  %618 = vmatpush.msra.mxu0 0.0
  %619 = vmatpush.msra.mxu0 0.0
  %620 = vmatpush.msra.mxu0 0.0
  %621 = vmatpush.msra.mxu0 0.0
  %622 = vmatpush.msra.mxu0 0.0
  %623 = vmatpush.msra.mxu0 %v606
  %624 = vmatmul.f32.gmra.mxu0 %v293
  %v625 = vpop.f32.mrf.mxu0
  %v626 = vadd.f32 0.0, %v625
  %627 = vmatmul.f32.gmra.mxu0 %v296
  %v628 = vpop.f32.mrf.mxu0
  %v629 = vadd.f32 0.0, %v628
  %630 = vmatmul.f32.gmra.mxu0 %v299
  %v631 = vpop.f32.mrf.mxu0
  %v632 = vadd.f32 0.0, %v631
  %633 = vmatmul.f32.gmra.mxu0 %v302
  %v634 = vpop.f32.mrf.mxu0
  %v635 = vadd.f32 0.0, %v634
  %636 = vdwg.mxu0
  %v637 = vmul.f32 %v626, %v594
  %v638 = vmul.f32 %v629, %v597
  %v639 = vmul.f32 %v632, %v600
  %v640 = vmul.f32 %v635, %v603
  %v642 = vsel %vm235, %v637, 0
  %v645 = vsel %vm235, %v638, 0
  %v648 = vsel %vm235, %v639, 0
  %v651 = vsel %vm235, %v640, 0
  %653 = vmatpush.msra.mxu0 0.0
  %654 = vmatpush.msra.mxu0 0.0
  %655 = vmatpush.msra.mxu0 0.0
  %656 = vmatpush.msra.mxu0 0.0
  %657 = vmatpush.msra.mxu0 0.0
  %658 = vmatpush.msra.mxu0 0.0
  %659 = vmatpush.msra.mxu0 0.0
  %660 = vmatpush.msra.mxu0 0.0
  %661 = vmatpush.msra.mxu0 0.0
  %662 = vmatpush.msra.mxu0 0.0
  %663 = vmatpush.msra.mxu0 0.0
  %664 = vmatpush.msra.mxu0 0.0
  %665 = vmatpush.msra.mxu0 %v72
  %666 = vmatpush.msra.mxu0 %v71
  %667 = vmatpush.msra.mxu0 %v70
  %668 = vmatpush.msra.mxu0 %v69
  %669 = vmatmul.f32.gmra.mxu0 %v642
  %v670 = vpop.f32.mrf.mxu0
  %v671 = vadd.f32 0.0, %v670
  %672 = vmatmul.f32.gmra.mxu0 %v645
  %v673 = vpop.f32.mrf.mxu0
  %v674 = vadd.f32 0.0, %v673
  %675 = vmatmul.f32.gmra.mxu0 %v648
  %v676 = vpop.f32.mrf.mxu0
  %v677 = vadd.f32 0.0, %v676
  %678 = vmatmul.f32.gmra.mxu0 %v651
  %v679 = vpop.f32.mrf.mxu0
  %v680 = vadd.f32 0.0, %v679
  %681 = vdwg.mxu0
  %v682 = vmul.f32 %v671, 0.35355338
  %v683 = vmul.f32 %v674, 0.35355338
  %v684 = vmul.f32 %v677, 0.35355338
  %v685 = vmul.f32 %v680, 0.35355338
  %vm686 = vcmask 31744
  %v687 = vsel %vm686, %v682, -inf
  %v688 = vsel %vm686, %v683, -inf
  %v689 = vsel %vm686, %v684, -inf
  %v690 = vsel %vm686, %v685, -inf
  %v691 = vmax.f32 %v687, %v688
  %v692 = vmax.f32 %v689, %v690
  %v693 = vmax.f32 %v691, %v692
  %v694 = vrot.slane %v693, 4
  %v695 = vmax.f32 %v693, %v694
  %v696 = vrot.slane %v695, 2
  %v697 = vmax.f32 %v695, %v696
  %v698 = vrot.slane %v697, 1
  %v699 = vmax.f32 %v697, %v698
  %v700 = vsub.f32 %v682, %v699
  %v701 = vsub.f32 %v683, %v699
  %v702 = vsub.f32 %v684, %v699
  %v703 = vsub.f32 %v685, %v699
  %v704 = vmul.f32 %v700, 1.442695
  %v705 = vpow.pop %v704
  %v706 = vmul.f32 %v701, 1.442695
  %v707 = vpow.pop %v706
  %v708 = vmul.f32 %v702, 1.442695
  %v709 = vpow.pop %v708
  %v710 = vmul.f32 %v703, 1.442695
  %v711 = vpow.pop %v710
  %712 = vmatpush.msra.mxu0 0.0
  %713 = vmatpush.msra.mxu0 0.0
  %714 = vmatpush.msra.mxu0 0.0
  %715 = vmatpush.msra.mxu0 0.0
  %716 = vmatpush.msra.mxu0 0.0
  %717 = vmatpush.msra.mxu0 0.0
  %718 = vmatpush.msra.mxu0 0.0
  %719 = vmatpush.msra.mxu0 0.0
  %720 = vmatpush.msra.mxu0 0.0
  %721 = vmatpush.msra.mxu0 0.0
  %722 = vmatpush.msra.mxu0 0.0
  %723 = vmatpush.msra.mxu0 0.0
  %724 = vmatpush.msra.mxu0 %v711
  %725 = vmatpush.msra.mxu0 %v709
  %726 = vmatpush.msra.mxu0 %v707
  %727 = vmatpush.msra.mxu0 %v705
  %728 = vmatmul.f32.gmra.mxu0 %v237
  %v729 = vpop.f32.mrf.mxu0
  %v730 = vadd.f32 0.0, %v729
  %731 = vdwg.mxu0
  %v733 = vsel %vm304, %v730, 0
  %735 = vmatpush.msra.mxu0 0.0
  %736 = vmatpush.msra.mxu0 0.0
  %737 = vmatpush.msra.mxu0 0.0
  %738 = vmatpush.msra.mxu0 0.0
  %739 = vmatpush.msra.mxu0 0.0
  %740 = vmatpush.msra.mxu0 0.0
  %741 = vmatpush.msra.mxu0 0.0
  %742 = vmatpush.msra.mxu0 0.0
  %743 = vmatpush.msra.mxu0 0.0
  %744 = vmatpush.msra.mxu0 0.0
  %745 = vmatpush.msra.mxu0 0.0
  %746 = vmatpush.msra.mxu0 0.0
  %747 = vmatpush.msra.mxu0 0.0
  %748 = vmatpush.msra.mxu0 0.0
  %749 = vmatpush.msra.mxu0 0.0
  %750 = vmatpush.msra.mxu0 %v733
  %751 = vmatmul.f32.gmra.mxu0 %v293
  %v752 = vpop.f32.mrf.mxu0
  %v753 = vadd.f32 0.0, %v752
  %754 = vmatmul.f32.gmra.mxu0 %v296
  %v755 = vpop.f32.mrf.mxu0
  %v756 = vadd.f32 0.0, %v755
  %757 = vmatmul.f32.gmra.mxu0 %v299
  %v758 = vpop.f32.mrf.mxu0
  %v759 = vadd.f32 0.0, %v758
  %760 = vmatmul.f32.gmra.mxu0 %v302
  %v761 = vpop.f32.mrf.mxu0
  %v762 = vadd.f32 0.0, %v761
  %763 = vdwg.mxu0
  %v764 = vrcp.pop %v753
  %v765 = vmul.f32 %v753, %v764
  %v766 = vsub.f32 1.0, %v765
  %v767 = vmul.f32 %v764, %v766
  %v768 = vadd.f32 %v764, %v767
  %vm769 = vweird.f32 %v753
  %vm770 = vweird.f32 %v764
  %vm771 = vmor %vm769, %vm770
  %v772 = vsel %vm771, %v764, %v768
  %v773 = vand.u32 2147483647, %v753
  %vm774 = vcmp.eq.f32.partialorder %v773, 8.507059e+37
  %v775 = vand.u32 %v753, 2147483648
  %v776 = vor.u32 1.1754944e-38, %v775
  %v777 = vsel %vm774, %v776, %v772
  %v778 = vmul.f32 %v705, %v777
  %v779 = vrcp.pop %v756
  %v780 = vmul.f32 %v756, %v779
  %v781 = vsub.f32 1.0, %v780
  %v782 = vmul.f32 %v779, %v781
  %v783 = vadd.f32 %v779, %v782
  %vm784 = vweird.f32 %v756
  %vm785 = vweird.f32 %v779
  %vm786 = vmor %vm784, %vm785
  %v787 = vsel %vm786, %v779, %v783
  %v788 = vand.u32 2147483647, %v756
  %vm789 = vcmp.eq.f32.partialorder %v788, 8.507059e+37
  %v790 = vand.u32 %v756, 2147483648
  %v791 = vor.u32 1.1754944e-38, %v790
  %v792 = vsel %vm789, %v791, %v787
  %v793 = vmul.f32 %v707, %v792
  %v794 = vrcp.pop %v759
  %v795 = vmul.f32 %v759, %v794
  %v796 = vsub.f32 1.0, %v795
  %v797 = vmul.f32 %v794, %v796
  %v798 = vadd.f32 %v794, %v797
  %vm799 = vweird.f32 %v759
  %vm800 = vweird.f32 %v794
  %vm801 = vmor %vm799, %vm800
  %v802 = vsel %vm801, %v794, %v798
  %v803 = vand.u32 2147483647, %v759
  %vm804 = vcmp.eq.f32.partialorder %v803, 8.507059e+37
  %v805 = vand.u32 %v759, 2147483648
  %v806 = vor.u32 1.1754944e-38, %v805
  %v807 = vsel %vm804, %v806, %v802
  %v808 = vmul.f32 %v709, %v807
  %v809 = vrcp.pop %v762
  %v810 = vmul.f32 %v762, %v809
  %v811 = vsub.f32 1.0, %v810
  %v812 = vmul.f32 %v809, %v811
  %v813 = vadd.f32 %v809, %v812
  %vm814 = vweird.f32 %v762
  %vm815 = vweird.f32 %v809
  %vm816 = vmor %vm814, %vm815
  %v817 = vsel %vm816, %v809, %v813
  %v818 = vand.u32 2147483647, %v762
  %vm819 = vcmp.eq.f32.partialorder %v818, 8.507059e+37
  %v820 = vand.u32 %v762, 2147483648
  %v821 = vor.u32 1.1754944e-38, %v820
  %v822 = vsel %vm819, %v821, %v817
  %v823 = vmul.f32 %v711, %v822
  %v825 = vsel %vm686, %v778, 0
  %v828 = vsel %vm686, %v793, 0
  %v831 = vsel %vm686, %v808, 0
  %v834 = vsel %vm686, %v823, 0
  %vm836 = vcmask 1043456
  %v838 = vsel %vm836, %v73, 0
  %840 = vmatpush.msra.mxu0 0.0
  %841 = vmatpush.msra.mxu0 0.0
  %842 = vmatpush.msra.mxu0 0.0
  %843 = vmatpush.msra.mxu0 0.0
  %844 = vmatpush.msra.mxu0 0.0
  %845 = vmatpush.msra.mxu0 0.0
  %846 = vmatpush.msra.mxu0 0.0
  %847 = vmatpush.msra.mxu0 0.0
  %848 = vmatpush.msra.mxu0 0.0
  %849 = vmatpush.msra.mxu0 0.0
  %850 = vmatpush.msra.mxu0 0.0
  %851 = vmatpush.msra.mxu0 0.0
  %852 = vmatpush.msra.mxu0 0.0
  %853 = vmatpush.msra.mxu0 0.0
  %854 = vmatpush.msra.mxu0 0.0
  %855 = vmatpush.msra.mxu0 %v838
  %856 = vmatmul.f32.gmra.mxu0 %v825
  %v857 = vpop.f32.mrf.mxu0
  %v858 = vadd.f32 0.0, %v857
  %859 = vmatmul.f32.gmra.mxu0 %v828
  %v860 = vpop.f32.mrf.mxu0
  %v861 = vadd.f32 0.0, %v860
  %862 = vmatmul.f32.gmra.mxu0 %v831
  %v863 = vpop.f32.mrf.mxu0
  %v864 = vadd.f32 0.0, %v863
  %865 = vmatmul.f32.gmra.mxu0 %v834
  %v866 = vpop.f32.mrf.mxu0
  %v867 = vadd.f32 0.0, %v866
  %868 = vdwg.mxu0
  %873 = vrot.lane.b32.xlu0 %v594, 96
  %v874 = vpop.permute.xlu0 %873
  %875 = vrot.lane.b32.xlu0 %v597, 96
  %v876 = vpop.permute.xlu0 %875
  %877 = vrot.lane.b32.xlu0 %v600, 96
  %v878 = vpop.permute.xlu0 %877
  %879 = vrot.lane.b32.xlu0 %v603, 96
  %v880 = vpop.permute.xlu0 %879
  %v885 = vmul.f32 %v858, %v874
  %v886 = vmul.f32 %v861, %v876
  %v887 = vmul.f32 %v864, %v878
  %v888 = vmul.f32 %v867, %v880
  %889 = vmatpush.msra.mxu0 0.0
  %890 = vmatpush.msra.mxu0 0.0
  %891 = vmatpush.msra.mxu0 0.0
  %892 = vmatpush.msra.mxu0 0.0
  %893 = vmatpush.msra.mxu0 0.0
  %894 = vmatpush.msra.mxu0 0.0
  %895 = vmatpush.msra.mxu0 0.0
  %896 = vmatpush.msra.mxu0 0.0
  %897 = vmatpush.msra.mxu0 0.0
  %898 = vmatpush.msra.mxu0 0.0
  %899 = vmatpush.msra.mxu0 0.0
  %900 = vmatpush.msra.mxu0 0.0
  %901 = vmatpush.msra.mxu0 %v888
  %902 = vmatpush.msra.mxu0 %v887
  %903 = vmatpush.msra.mxu0 %v886
  %904 = vmatpush.msra.mxu0 %v885
  %905 = vmatmul.f32.gmra.mxu0 %v237
  %v906 = vpop.f32.mrf.mxu0
  %v907 = vadd.f32 0.0, %v906
  %908 = vdwg.mxu0
  %v909 = vld [vmem:[%s8] sm:$0xff]
  %v910 = vld [vmem:[%s8 + $0x8] sm:$0xff]
  %v911 = vld [vmem:[%s8 + $0x10] sm:$0xff]
  %v912 = vld [vmem:[%s8 + $0x18] sm:$0xff]
  %v914 = vsel %vm235, %v907, 0
  %916 = vmatpush.msra.mxu0 0.0
  %917 = vmatpush.msra.mxu0 0.0
  %918 = vmatpush.msra.mxu0 0.0
  %919 = vmatpush.msra.mxu0 0.0
  %920 = vmatpush.msra.mxu0 0.0
  %921 = vmatpush.msra.mxu0 0.0
  %922 = vmatpush.msra.mxu0 0.0
  %923 = vmatpush.msra.mxu0 0.0
  %924 = vmatpush.msra.mxu0 0.0
  %925 = vmatpush.msra.mxu0 0.0
  %926 = vmatpush.msra.mxu0 0.0
  %927 = vmatpush.msra.mxu0 0.0
  %928 = vmatpush.msra.mxu0 %v912
  %929 = vmatpush.msra.mxu0 %v911
  %930 = vmatpush.msra.mxu0 %v910
  %931 = vmatpush.msra.mxu0 %v909
  %932 = vmatmul.f32.gmra.mxu0 %v914
  %v933 = vpop.f32.mrf.mxu0
  %v934 = vadd.f32 0.0, %v933
  %935 = vdwg.mxu0
  %v936 = vadd.f32 %v532, %v934
  %v937 = vld [vmem:[%s9] sm:$0xff]
  %v938 = vld [vmem:[%s9 + $0x8] sm:$0xff]
  %v939 = vld [vmem:[%s9 + $0x10] sm:$0xff]
  %v940 = vld [vmem:[%s9 + $0x18] sm:$0xff]
  %v941 = vld [vmem:[%s10] sm:$0x1]
  %v943 = vperm.slane %v941, 0
  %v946 = vsel %vm235, %v936, 0
  %948 = vmatpush.msra.mxu0 0.0
  %949 = vmatpush.msra.mxu0 0.0
  %950 = vmatpush.msra.mxu0 0.0
  %951 = vmatpush.msra.mxu0 0.0
  %952 = vmatpush.msra.mxu0 0.0
  %953 = vmatpush.msra.mxu0 0.0
  %954 = vmatpush.msra.mxu0 0.0
  %955 = vmatpush.msra.mxu0 0.0
  %956 = vmatpush.msra.mxu0 0.0
  %957 = vmatpush.msra.mxu0 0.0
  %958 = vmatpush.msra.mxu0 0.0
  %959 = vmatpush.msra.mxu0 0.0
  %960 = vmatpush.msra.mxu0 %v940
  %961 = vmatpush.msra.mxu0 %v939
  %962 = vmatpush.msra.mxu0 %v938
  %963 = vmatpush.msra.mxu0 %v937
  %964 = vmatmul.f32.gmra.mxu0 %v946
  %v965 = vpop.f32.mrf.mxu0
  %v966 = vadd.f32 %v943, %v965
  %967 = vdwg.mxu0
  %v968 = vmax.f32 %v966, 0.0
  %v969 = vld [vmem:[%s11] sm:$0xff]
  %v970 = vld [vmem:[%s11 + $0x8] sm:$0xff]
  %v971 = vld [vmem:[%s11 + $0x10] sm:$0xff]
  %v972 = vld [vmem:[%s11 + $0x18] sm:$0xff]
  %v973 = vld [vmem:[%s11 + $0x20] sm:$0xff]
  %v974 = vld [vmem:[%s11 + $0x28] sm:$0xff]
  %v975 = vld [vmem:[%s11 + $0x30] sm:$0xff]
  %v976 = vld [vmem:[%s11 + $0x38] sm:$0xff]
  %v977 = vld [vmem:[%s11 + $0x40] sm:$0xff]
  %v978 = vld [vmem:[%s11 + $0x48] sm:$0xff]
  %v979 = vld [vmem:[%s11 + $0x50] sm:$0xff]
  %v980 = vld [vmem:[%s11 + $0x58] sm:$0xff]
  %v981 = vld [vmem:[%s11 + $0x60] sm:$0xff]
  %v982 = vld [vmem:[%s11 + $0x68] sm:$0xff]
  %v983 = vld [vmem:[%s11 + $0x70] sm:$0xff]
  %v984 = vld [vmem:[%s11 + $0x78] sm:$0xff]
  %985 = vmatpush.msra.mxu0 %v984
  %986 = vmatpush.msra.mxu0 %v983
  %987 = vmatpush.msra.mxu0 %v982
  %988 = vmatpush.msra.mxu0 %v981
  %989 = vmatpush.msra.mxu0 %v980
  %990 = vmatpush.msra.mxu0 %v979
  %991 = vmatpush.msra.mxu0 %v978
  %992 = vmatpush.msra.mxu0 %v977
  %993 = vmatpush.msra.mxu0 %v976
  %994 = vmatpush.msra.mxu0 %v975
  %995 = vmatpush.msra.mxu0 %v974
  %996 = vmatpush.msra.mxu0 %v973
  %997 = vmatpush.msra.mxu0 %v972
  %998 = vmatpush.msra.mxu0 %v971
  %999 = vmatpush.msra.mxu0 %v970
  %1000 = vmatpush.msra.mxu0 %v969
  %1001 = vmatmul.f32.gmra.mxu0 %v968
  %v1002 = vpop.f32.mrf.mxu0
  %v1003 = vadd.f32 0.0, %v1002
  %1004 = vdwg.mxu0
  %v1005 = vadd.f32 %v936, %v1003
  %v1006 = vld [vmem:[%s12] sm:$0x1]
  %v1008 = vperm.slane %v1006, 0
  %v1010 = vadd.f32 %v1005, %v1008
  %s1011 = scalar_lea.vmem %s6, 32
  %v1012 = vld [vmem:[%s1011] sm:$0xff]
  %v1013 = vld [vmem:[%s1011 + $0x8] sm:$0xff]
  %v1014 = vld [vmem:[%s1011 + $0x10] sm:$0xff]
  %v1015 = vld [vmem:[%s1011 + $0x18] sm:$0xff]
  %v1017 = vsel %vm235, %v1010, 0
  %1019 = vmatpush.msra.mxu0 0.0
  %1020 = vmatpush.msra.mxu0 0.0
  %1021 = vmatpush.msra.mxu0 0.0
  %1022 = vmatpush.msra.mxu0 0.0
  %1023 = vmatpush.msra.mxu0 0.0
  %1024 = vmatpush.msra.mxu0 0.0
  %1025 = vmatpush.msra.mxu0 0.0
  %1026 = vmatpush.msra.mxu0 0.0
  %1027 = vmatpush.msra.mxu0 0.0
  %1028 = vmatpush.msra.mxu0 0.0
  %1029 = vmatpush.msra.mxu0 0.0
  %1030 = vmatpush.msra.mxu0 0.0
  %1031 = vmatpush.msra.mxu0 %v1015
  %1032 = vmatpush.msra.mxu0 %v1014
  %1033 = vmatpush.msra.mxu0 %v1013
  %1034 = vmatpush.msra.mxu0 %v1012
  %1035 = vmatmul.f32.gmra.mxu0 %v1017
  %v1036 = vpop.f32.mrf.mxu0
  %v1037 = vadd.f32 0.0, %v1036
  %1038 = vdwg.mxu0
  %s1039 = scalar_lea.vmem %s7, 32
  %v1040 = vld [vmem:[%s1039] sm:$0xff]
  %v1041 = vld [vmem:[%s1039 + $0x8] sm:$0xff]
  %v1042 = vld [vmem:[%s1039 + $0x10] sm:$0xff]
  %v1043 = vld [vmem:[%s1039 + $0x18] sm:$0xff]
  %1044 = vmatpush.msra.mxu0 0.0
  %1045 = vmatpush.msra.mxu0 0.0
  %1046 = vmatpush.msra.mxu0 0.0
  %1047 = vmatpush.msra.mxu0 0.0
  %1048 = vmatpush.msra.mxu0 0.0
  %1049 = vmatpush.msra.mxu0 0.0
  %1050 = vmatpush.msra.mxu0 0.0
  %1051 = vmatpush.msra.mxu0 0.0
  %1052 = vmatpush.msra.mxu0 0.0
  %1053 = vmatpush.msra.mxu0 0.0
  %1054 = vmatpush.msra.mxu0 0.0
  %1055 = vmatpush.msra.mxu0 0.0
  %1056 = vmatpush.msra.mxu0 %v1043
  %1057 = vmatpush.msra.mxu0 %v1042
  %1058 = vmatpush.msra.mxu0 %v1041
  %1059 = vmatpush.msra.mxu0 %v1040
  %1060 = vmatmul.f32.gmra.mxu0 %v565
  %v1061 = vpop.f32.mrf.mxu0
  %v1062 = vadd.f32 0.0, %v1061
  %1063 = vmatmul.f32.gmra.mxu0 %v568
  %v1064 = vpop.f32.mrf.mxu0
  %v1065 = vadd.f32 0.0, %v1064
  %1066 = vmatmul.f32.gmra.mxu0 %v571
  %v1067 = vpop.f32.mrf.mxu0
  %v1068 = vadd.f32 0.0, %v1067
  %1069 = vmatmul.f32.gmra.mxu0 %v574
  %v1070 = vpop.f32.mrf.mxu0
  %v1071 = vadd.f32 0.0, %v1070
  %1072 = vdwg.mxu0
  %v1074 = vsel %vm304, %v1037, 0
  %1076 = vmatpush.msra.mxu0 0.0
  %1077 = vmatpush.msra.mxu0 0.0
  %1078 = vmatpush.msra.mxu0 0.0
  %1079 = vmatpush.msra.mxu0 0.0
  %1080 = vmatpush.msra.mxu0 0.0
  %1081 = vmatpush.msra.mxu0 0.0
  %1082 = vmatpush.msra.mxu0 0.0
  %1083 = vmatpush.msra.mxu0 0.0
  %1084 = vmatpush.msra.mxu0 0.0
  %1085 = vmatpush.msra.mxu0 0.0
  %1086 = vmatpush.msra.mxu0 0.0
  %1087 = vmatpush.msra.mxu0 0.0
  %1088 = vmatpush.msra.mxu0 0.0
  %1089 = vmatpush.msra.mxu0 0.0
  %1090 = vmatpush.msra.mxu0 0.0
  %1091 = vmatpush.msra.mxu0 %v1074
  %1092 = vmatmul.f32.gmra.mxu0 %v293
  %v1093 = vpop.f32.mrf.mxu0
  %v1094 = vadd.f32 0.0, %v1093
  %1095 = vmatmul.f32.gmra.mxu0 %v296
  %v1096 = vpop.f32.mrf.mxu0
  %v1097 = vadd.f32 0.0, %v1096
  %1098 = vmatmul.f32.gmra.mxu0 %v299
  %v1099 = vpop.f32.mrf.mxu0
  %v1100 = vadd.f32 0.0, %v1099
  %1101 = vmatmul.f32.gmra.mxu0 %v302
  %v1102 = vpop.f32.mrf.mxu0
  %v1103 = vadd.f32 0.0, %v1102
  %1104 = vdwg.mxu0
  %v1105 = vmul.f32 %v1094, %v1062
  %v1106 = vmul.f32 %v1097, %v1065
  %v1107 = vmul.f32 %v1100, %v1068
  %v1108 = vmul.f32 %v1103, %v1071
  %v1110 = vsel %vm235, %v1105, 0
  %v1113 = vsel %vm235, %v1106, 0
  %v1116 = vsel %vm235, %v1107, 0
  %v1119 = vsel %vm235, %v1108, 0
  %1121 = vmatpush.msra.mxu0 0.0
  %1122 = vmatpush.msra.mxu0 0.0
  %1123 = vmatpush.msra.mxu0 0.0
  %1124 = vmatpush.msra.mxu0 0.0
  %1125 = vmatpush.msra.mxu0 0.0
  %1126 = vmatpush.msra.mxu0 0.0
  %1127 = vmatpush.msra.mxu0 0.0
  %1128 = vmatpush.msra.mxu0 0.0
  %1129 = vmatpush.msra.mxu0 0.0
  %1130 = vmatpush.msra.mxu0 0.0
  %1131 = vmatpush.msra.mxu0 0.0
  %1132 = vmatpush.msra.mxu0 0.0
  %1133 = vmatpush.msra.mxu0 %v72
  %1134 = vmatpush.msra.mxu0 %v71
  %1135 = vmatpush.msra.mxu0 %v70
  %1136 = vmatpush.msra.mxu0 %v69
  %1137 = vmatmul.f32.gmra.mxu0 %v1110
  %v1138 = vpop.f32.mrf.mxu0
  %v1139 = vadd.f32 0.0, %v1138
  %1140 = vmatmul.f32.gmra.mxu0 %v1113
  %v1141 = vpop.f32.mrf.mxu0
  %v1142 = vadd.f32 0.0, %v1141
  %1143 = vmatmul.f32.gmra.mxu0 %v1116
  %v1144 = vpop.f32.mrf.mxu0
  %v1145 = vadd.f32 0.0, %v1144
  %1146 = vmatmul.f32.gmra.mxu0 %v1119
  %v1147 = vpop.f32.mrf.mxu0
  %v1148 = vadd.f32 0.0, %v1147
  %1149 = vdwg.mxu0
  %v1150 = vmul.f32 %v1139, 0.35355338
  %v1151 = vmul.f32 %v1142, 0.35355338
  %v1152 = vmul.f32 %v1145, 0.35355338
  %v1153 = vmul.f32 %v1148, 0.35355338
  %v1154 = vsel %vm686, %v1150, -inf
  %v1155 = vsel %vm686, %v1151, -inf
  %v1156 = vsel %vm686, %v1152, -inf
  %v1157 = vsel %vm686, %v1153, -inf
  %v1158 = vmax.f32 %v1154, %v1155
  %v1159 = vmax.f32 %v1156, %v1157
  %v1160 = vmax.f32 %v1158, %v1159
  %v1161 = vrot.slane %v1160, 4
  %v1162 = vmax.f32 %v1160, %v1161
  %v1163 = vrot.slane %v1162, 2
  %v1164 = vmax.f32 %v1162, %v1163
  %v1165 = vrot.slane %v1164, 1
  %v1166 = vmax.f32 %v1164, %v1165
  %v1167 = vsub.f32 %v1150, %v1166
  %v1168 = vsub.f32 %v1151, %v1166
  %v1169 = vsub.f32 %v1152, %v1166
  %v1170 = vsub.f32 %v1153, %v1166
  %v1171 = vmul.f32 %v1167, 1.442695
  %v1172 = vpow.pop %v1171
  %v1173 = vmul.f32 %v1168, 1.442695
  %v1174 = vpow.pop %v1173
  %v1175 = vmul.f32 %v1169, 1.442695
  %v1176 = vpow.pop %v1175
  %v1177 = vmul.f32 %v1170, 1.442695
  %v1178 = vpow.pop %v1177
  %1179 = vmatpush.msra.mxu0 0.0
  %1180 = vmatpush.msra.mxu0 0.0
  %1181 = vmatpush.msra.mxu0 0.0
  %1182 = vmatpush.msra.mxu0 0.0
  %1183 = vmatpush.msra.mxu0 0.0
  %1184 = vmatpush.msra.mxu0 0.0
  %1185 = vmatpush.msra.mxu0 0.0
  %1186 = vmatpush.msra.mxu0 0.0
  %1187 = vmatpush.msra.mxu0 0.0
  %1188 = vmatpush.msra.mxu0 0.0
  %1189 = vmatpush.msra.mxu0 0.0
  %1190 = vmatpush.msra.mxu0 0.0
  %1191 = vmatpush.msra.mxu0 %v1178
  %1192 = vmatpush.msra.mxu0 %v1176
  %1193 = vmatpush.msra.mxu0 %v1174
  %1194 = vmatpush.msra.mxu0 %v1172
  %1195 = vmatmul.f32.gmra.mxu0 %v237
  %v1196 = vpop.f32.mrf.mxu0
  %v1197 = vadd.f32 0.0, %v1196
  %1198 = vdwg.mxu0
  %v1200 = vsel %vm304, %v1197, 0
  %1202 = vmatpush.msra.mxu0 0.0
  %1203 = vmatpush.msra.mxu0 0.0
  %1204 = vmatpush.msra.mxu0 0.0
  %1205 = vmatpush.msra.mxu0 0.0
  %1206 = vmatpush.msra.mxu0 0.0
  %1207 = vmatpush.msra.mxu0 0.0
  %1208 = vmatpush.msra.mxu0 0.0
  %1209 = vmatpush.msra.mxu0 0.0
  %1210 = vmatpush.msra.mxu0 0.0
  %1211 = vmatpush.msra.mxu0 0.0
  %1212 = vmatpush.msra.mxu0 0.0
  %1213 = vmatpush.msra.mxu0 0.0
  %1214 = vmatpush.msra.mxu0 0.0
  %1215 = vmatpush.msra.mxu0 0.0
  %1216 = vmatpush.msra.mxu0 0.0
  %1217 = vmatpush.msra.mxu0 %v1200
  %1218 = vmatmul.f32.gmra.mxu0 %v293
  %v1219 = vpop.f32.mrf.mxu0
  %v1220 = vadd.f32 0.0, %v1219
  %1221 = vmatmul.f32.gmra.mxu0 %v296
  %v1222 = vpop.f32.mrf.mxu0
  %v1223 = vadd.f32 0.0, %v1222
  %1224 = vmatmul.f32.gmra.mxu0 %v299
  %v1225 = vpop.f32.mrf.mxu0
  %v1226 = vadd.f32 0.0, %v1225
  %1227 = vmatmul.f32.gmra.mxu0 %v302
  %v1228 = vpop.f32.mrf.mxu0
  %v1229 = vadd.f32 0.0, %v1228
  %1230 = vdwg.mxu0
  %v1231 = vrcp.pop %v1220
  %v1232 = vmul.f32 %v1220, %v1231
  %v1233 = vsub.f32 1.0, %v1232
  %v1234 = vmul.f32 %v1231, %v1233
  %v1235 = vadd.f32 %v1231, %v1234
  %vm1236 = vweird.f32 %v1220
  %vm1237 = vweird.f32 %v1231
  %vm1238 = vmor %vm1236, %vm1237
  %v1239 = vsel %vm1238, %v1231, %v1235
  %v1240 = vand.u32 2147483647, %v1220
  %vm1241 = vcmp.eq.f32.partialorder %v1240, 8.507059e+37
  %v1242 = vand.u32 %v1220, 2147483648
  %v1243 = vor.u32 1.1754944e-38, %v1242
  %v1244 = vsel %vm1241, %v1243, %v1239
  %v1245 = vmul.f32 %v1172, %v1244
  %v1246 = vrcp.pop %v1223
  %v1247 = vmul.f32 %v1223, %v1246
  %v1248 = vsub.f32 1.0, %v1247
  %v1249 = vmul.f32 %v1246, %v1248
  %v1250 = vadd.f32 %v1246, %v1249
  %vm1251 = vweird.f32 %v1223
  %vm1252 = vweird.f32 %v1246
  %vm1253 = vmor %vm1251, %vm1252
  %v1254 = vsel %vm1253, %v1246, %v1250
  %v1255 = vand.u32 2147483647, %v1223
  %vm1256 = vcmp.eq.f32.partialorder %v1255, 8.507059e+37
  %v1257 = vand.u32 %v1223, 2147483648
  %v1258 = vor.u32 1.1754944e-38, %v1257
  %v1259 = vsel %vm1256, %v1258, %v1254
  %v1260 = vmul.f32 %v1174, %v1259
  %v1261 = vrcp.pop %v1226
  %v1262 = vmul.f32 %v1226, %v1261
  %v1263 = vsub.f32 1.0, %v1262
  %v1264 = vmul.f32 %v1261, %v1263
  %v1265 = vadd.f32 %v1261, %v1264
  %vm1266 = vweird.f32 %v1226
  %vm1267 = vweird.f32 %v1261
  %vm1268 = vmor %vm1266, %vm1267
  %v1269 = vsel %vm1268, %v1261, %v1265
  %v1270 = vand.u32 2147483647, %v1226
  %vm1271 = vcmp.eq.f32.partialorder %v1270, 8.507059e+37
  %v1272 = vand.u32 %v1226, 2147483648
  %v1273 = vor.u32 1.1754944e-38, %v1272
  %v1274 = vsel %vm1271, %v1273, %v1269
  %v1275 = vmul.f32 %v1176, %v1274
  %v1276 = vrcp.pop %v1229
  %v1277 = vmul.f32 %v1229, %v1276
  %v1278 = vsub.f32 1.0, %v1277
  %v1279 = vmul.f32 %v1276, %v1278
  %v1280 = vadd.f32 %v1276, %v1279
  %vm1281 = vweird.f32 %v1229
  %vm1282 = vweird.f32 %v1276
  %vm1283 = vmor %vm1281, %vm1282
  %v1284 = vsel %vm1283, %v1276, %v1280
  %v1285 = vand.u32 2147483647, %v1229
  %vm1286 = vcmp.eq.f32.partialorder %v1285, 8.507059e+37
  %v1287 = vand.u32 %v1229, 2147483648
  %v1288 = vor.u32 1.1754944e-38, %v1287
  %v1289 = vsel %vm1286, %v1288, %v1284
  %v1290 = vmul.f32 %v1178, %v1289
  %v1292 = vsel %vm686, %v1245, 0
  %v1295 = vsel %vm686, %v1260, 0
  %v1298 = vsel %vm686, %v1275, 0
  %v1301 = vsel %vm686, %v1290, 0
  %1303 = vmatpush.msra.mxu0 0.0
  %1304 = vmatpush.msra.mxu0 0.0
  %1305 = vmatpush.msra.mxu0 0.0
  %1306 = vmatpush.msra.mxu0 0.0
  %1307 = vmatpush.msra.mxu0 0.0
  %1308 = vmatpush.msra.mxu0 0.0
  %1309 = vmatpush.msra.mxu0 0.0
  %1310 = vmatpush.msra.mxu0 0.0
  %1311 = vmatpush.msra.mxu0 0.0
  %1312 = vmatpush.msra.mxu0 0.0
  %1313 = vmatpush.msra.mxu0 0.0
  %1314 = vmatpush.msra.mxu0 0.0
  %1315 = vmatpush.msra.mxu0 0.0
  %1316 = vmatpush.msra.mxu0 0.0
  %1317 = vmatpush.msra.mxu0 0.0
  %1318 = vmatpush.msra.mxu0 %v838
  %1319 = vmatmul.f32.gmra.mxu0 %v1292
  %v1320 = vpop.f32.mrf.mxu0
  %v1321 = vadd.f32 0.0, %v1320
  %1322 = vmatmul.f32.gmra.mxu0 %v1295
  %v1323 = vpop.f32.mrf.mxu0
  %v1324 = vadd.f32 0.0, %v1323
  %1325 = vmatmul.f32.gmra.mxu0 %v1298
  %v1326 = vpop.f32.mrf.mxu0
  %v1327 = vadd.f32 0.0, %v1326
  %1328 = vmatmul.f32.gmra.mxu0 %v1301
  %v1329 = vpop.f32.mrf.mxu0
  %v1330 = vadd.f32 0.0, %v1329
  %1331 = vdwg.mxu0
  %1336 = vrot.lane.b32.xlu0 %v1062, 96
  %v1337 = vpop.permute.xlu0 %1336
  %1338 = vrot.lane.b32.xlu0 %v1065, 96
  %v1339 = vpop.permute.xlu0 %1338
  %1340 = vrot.lane.b32.xlu0 %v1068, 96
  %v1341 = vpop.permute.xlu0 %1340
  %1342 = vrot.lane.b32.xlu0 %v1071, 96
  %v1343 = vpop.permute.xlu0 %1342
  %v1348 = vmul.f32 %v1321, %v1337
  %v1349 = vmul.f32 %v1324, %v1339
  %v1350 = vmul.f32 %v1327, %v1341
  %v1351 = vmul.f32 %v1330, %v1343
  %1352 = vmatpush.msra.mxu0 0.0
  %1353 = vmatpush.msra.mxu0 0.0
  %1354 = vmatpush.msra.mxu0 0.0
  %1355 = vmatpush.msra.mxu0 0.0
  %1356 = vmatpush.msra.mxu0 0.0
  %1357 = vmatpush.msra.mxu0 0.0
  %1358 = vmatpush.msra.mxu0 0.0
  %1359 = vmatpush.msra.mxu0 0.0
  %1360 = vmatpush.msra.mxu0 0.0
  %1361 = vmatpush.msra.mxu0 0.0
  %1362 = vmatpush.msra.mxu0 0.0
  %1363 = vmatpush.msra.mxu0 0.0
  %1364 = vmatpush.msra.mxu0 %v1351
  %1365 = vmatpush.msra.mxu0 %v1350
  %1366 = vmatpush.msra.mxu0 %v1349
  %1367 = vmatpush.msra.mxu0 %v1348
  %1368 = vmatmul.f32.gmra.mxu0 %v237
  %v1369 = vpop.f32.mrf.mxu0
  %v1370 = vadd.f32 0.0, %v1369
  %1371 = vdwg.mxu0
  %s1372 = scalar_lea.vmem %s8, 32
  %v1373 = vld [vmem:[%s1372] sm:$0xff]
  %v1374 = vld [vmem:[%s1372 + $0x8] sm:$0xff]
  %v1375 = vld [vmem:[%s1372 + $0x10] sm:$0xff]
  %v1376 = vld [vmem:[%s1372 + $0x18] sm:$0xff]
  %v1378 = vsel %vm235, %v1370, 0
  %1380 = vmatpush.msra.mxu0 0.0
  %1381 = vmatpush.msra.mxu0 0.0
  %1382 = vmatpush.msra.mxu0 0.0
  %1383 = vmatpush.msra.mxu0 0.0
  %1384 = vmatpush.msra.mxu0 0.0
  %1385 = vmatpush.msra.mxu0 0.0
  %1386 = vmatpush.msra.mxu0 0.0
  %1387 = vmatpush.msra.mxu0 0.0
  %1388 = vmatpush.msra.mxu0 0.0
  %1389 = vmatpush.msra.mxu0 0.0
  %1390 = vmatpush.msra.mxu0 0.0
  %1391 = vmatpush.msra.mxu0 0.0
  %1392 = vmatpush.msra.mxu0 %v1376
  %1393 = vmatpush.msra.mxu0 %v1375
  %1394 = vmatpush.msra.mxu0 %v1374
  %1395 = vmatpush.msra.mxu0 %v1373
  %1396 = vmatmul.f32.gmra.mxu0 %v1378
  %v1397 = vpop.f32.mrf.mxu0
  %v1398 = vadd.f32 0.0, %v1397
  %1399 = vdwg.mxu0
  %v1400 = vadd.f32 %v1010, %v1398
  %s1401 = scalar_lea.vmem %s9, 32
  %v1402 = vld [vmem:[%s1401] sm:$0xff]
  %v1403 = vld [vmem:[%s1401 + $0x8] sm:$0xff]
  %v1404 = vld [vmem:[%s1401 + $0x10] sm:$0xff]
  %v1405 = vld [vmem:[%s1401 + $0x18] sm:$0xff]
  %s1406 = scalar_lea.vmem %s10, 1
  %v1407 = vld [vmem:[%s1406] sm:$0x1]
  %v1409 = vperm.slane %v1407, 0
  %v1412 = vsel %vm235, %v1400, 0
  %1414 = vmatpush.msra.mxu0 0.0
  %1415 = vmatpush.msra.mxu0 0.0
  %1416 = vmatpush.msra.mxu0 0.0
  %1417 = vmatpush.msra.mxu0 0.0
  %1418 = vmatpush.msra.mxu0 0.0
  %1419 = vmatpush.msra.mxu0 0.0
  %1420 = vmatpush.msra.mxu0 0.0
  %1421 = vmatpush.msra.mxu0 0.0
  %1422 = vmatpush.msra.mxu0 0.0
  %1423 = vmatpush.msra.mxu0 0.0
  %1424 = vmatpush.msra.mxu0 0.0
  %1425 = vmatpush.msra.mxu0 0.0
  %1426 = vmatpush.msra.mxu0 %v1405
  %1427 = vmatpush.msra.mxu0 %v1404
  %1428 = vmatpush.msra.mxu0 %v1403
  %1429 = vmatpush.msra.mxu0 %v1402
  %1430 = vmatmul.f32.gmra.mxu0 %v1412
  %v1431 = vpop.f32.mrf.mxu0
  %v1432 = vadd.f32 %v1409, %v1431
  %1433 = vdwg.mxu0
  %v1434 = vmax.f32 %v1432, 0.0
  %s1435 = scalar_lea.vmem %s11, 128
  %v1436 = vld [vmem:[%s1435] sm:$0xff]
  %v1437 = vld [vmem:[%s1435 + $0x8] sm:$0xff]
  %v1438 = vld [vmem:[%s1435 + $0x10] sm:$0xff]
  %v1439 = vld [vmem:[%s1435 + $0x18] sm:$0xff]
  %v1440 = vld [vmem:[%s1435 + $0x20] sm:$0xff]
  %v1441 = vld [vmem:[%s1435 + $0x28] sm:$0xff]
  %v1442 = vld [vmem:[%s1435 + $0x30] sm:$0xff]
  %v1443 = vld [vmem:[%s1435 + $0x38] sm:$0xff]
  %v1444 = vld [vmem:[%s1435 + $0x40] sm:$0xff]
  %v1445 = vld [vmem:[%s1435 + $0x48] sm:$0xff]
  %v1446 = vld [vmem:[%s1435 + $0x50] sm:$0xff]
  %v1447 = vld [vmem:[%s1435 + $0x58] sm:$0xff]
  %v1448 = vld [vmem:[%s1435 + $0x60] sm:$0xff]
  %v1449 = vld [vmem:[%s1435 + $0x68] sm:$0xff]
  %v1450 = vld [vmem:[%s1435 + $0x70] sm:$0xff]
  %v1451 = vld [vmem:[%s1435 + $0x78] sm:$0xff]
  %1452 = vmatpush.msra.mxu0 %v1451
  %1453 = vmatpush.msra.mxu0 %v1450
  %1454 = vmatpush.msra.mxu0 %v1449
  %1455 = vmatpush.msra.mxu0 %v1448
  %1456 = vmatpush.msra.mxu0 %v1447
  %1457 = vmatpush.msra.mxu0 %v1446
  %1458 = vmatpush.msra.mxu0 %v1445
  %1459 = vmatpush.msra.mxu0 %v1444
  %1460 = vmatpush.msra.mxu0 %v1443
  %1461 = vmatpush.msra.mxu0 %v1442
  %1462 = vmatpush.msra.mxu0 %v1441
  %1463 = vmatpush.msra.mxu0 %v1440
  %1464 = vmatpush.msra.mxu0 %v1439
  %1465 = vmatpush.msra.mxu0 %v1438
  %1466 = vmatpush.msra.mxu0 %v1437
  %1467 = vmatpush.msra.mxu0 %v1436
  %1468 = vmatmul.f32.gmra.mxu0 %v1434
  %v1469 = vpop.f32.mrf.mxu0
  %v1470 = vadd.f32 0.0, %v1469
  %1471 = vdwg.mxu0
  %v1472 = vadd.f32 %v1400, %v1470
  %s1473 = scalar_lea.vmem %s12, 1
  %v1474 = vld [vmem:[%s1473] sm:$0x1]
  %v1476 = vperm.slane %v1474, 0
  %v1478 = vadd.f32 %v1472, %v1476
  %v1479 = vld [vmem:[%s13] sm:$0xff]
  %v1480 = vld [vmem:[%s13 + $0x8] sm:$0xff]
  %v1481 = vld [vmem:[%s13 + $0x10] sm:$0xff]
  %v1482 = vld [vmem:[%s13 + $0x18] sm:$0xff]
  %v1483 = vld [vmem:[#allocation2] sm:$0x1]
  %v1485 = vperm.slane %v1483, 0
  %v1488 = vsel %vm235, %v1478, 0
  %1490 = vmatpush.msra.mxu0 0.0
  %1491 = vmatpush.msra.mxu0 0.0
  %1492 = vmatpush.msra.mxu0 0.0
  %1493 = vmatpush.msra.mxu0 0.0
  %1494 = vmatpush.msra.mxu0 0.0
  %1495 = vmatpush.msra.mxu0 0.0
  %1496 = vmatpush.msra.mxu0 0.0
  %1497 = vmatpush.msra.mxu0 0.0
  %1498 = vmatpush.msra.mxu0 0.0
  %1499 = vmatpush.msra.mxu0 0.0
  %1500 = vmatpush.msra.mxu0 0.0
  %1501 = vmatpush.msra.mxu0 0.0
  %1502 = vmatpush.msra.mxu0 %v1482
  %1503 = vmatpush.msra.mxu0 %v1481
  %1504 = vmatpush.msra.mxu0 %v1480
  %1505 = vmatpush.msra.mxu0 %v1479
  %1506 = vmatmul.f32.gmra.mxu0 %v1488
  %v1507 = vpop.f32.mrf.mxu0
  %v1508 = vadd.f32 %v1485, %v1507
  %1509 = vdwg.mxu0
  %1511 = vset.pattern.permute.xlu0 0
  %1512 = vperm.xlu0 %1511, %v1508
  %v1513 = vpop.permute.xlu0 %1512
  %1515 = vst [vmem:[%s19] sm:$0x3] %v1513
  // Predicated region
  $region78: #{critic_forward.1} parent=0 // pred_check
    _
  $region79: #{critic_forward.1} parent=0 // pred_check_branch
    %1517 = sbr.rel (0) target = $region81
  $region80: #{critic_forward.1} parent=0 // pred_region
    _
  $region81: #{critic_forward.1} parent=0 // pred_fallthru
    _
  // Predicated region
  $region82: #{critic_forward.1} parent=0 // pred_check
    _
  $region83: #{critic_forward.1} parent=0 // pred_check_branch
    %1519 = sbr.rel (0) target = $region85
  $region84: #{critic_forward.1} parent=0 // pred_region
    _
  $region85: #{critic_forward.1} parent=0 // pred_fallthru
    _

</llo_original>
